<compile_context>
chip_gen: v5e
topology: v5e:2x2
jax: 0.10.0
libtpu: 0.0.40
codegen_flags: <defaults>
</compile_context>

<pallas_src>
import functools

import jax
import jax.numpy as jnp
from jax.experimental import pallas as pl
from jax.experimental.pallas import tpu as pltpu

_LANE = 128
# <= 48 MiB: safe on v7x (64 MiB physical); could be raised to ~100 MiB on
# v5e/v6e for larger batch tiles.
_VMEM_LIMIT_BYTES = 48 * 1024 * 1024


def _round_up(n, m=_LANE):
    return ((n + m - 1) // m) * m


def _apply_act(x, leaky):
    if leaky:
        return jnp.maximum(x, 0.01 * x)   # == LeakyReLU(0.01), no select
    return jnp.maximum(x, 0.0)


def _pick_batch_tile(B, m_per_image, target_m=512, max_bt=16):
    """Largest divisor of B (capped) so each grid step has ~target_m dot rows."""
    want = max(1, min(max_bt, -(-target_m // max(1, m_per_image))))
    bt = 1
    for d in range(1, B + 1):
        if B % d == 0 and d <= want:
            bt = d
    return bt


def _pick_row_tile(B, cap=512):
    """Largest divisor of B that is <= cap (so no remainder rows are dropped)."""
    t = 1
    for d in range(1, min(B, cap) + 1):
        if B % d == 0:
            t = d
    return t


# ---------------------------------------------------------------------------
# Fused conv kernel: in-kernel im2col (all taps merged into one MXU dot)
#                    + bias + (Leaky)ReLU, BT images per grid step.
# ---------------------------------------------------------------------------
def _conv_im2col_kernel(x_ref, w_ref, b_ref, o_ref, *, KH, KW, OH, OW, leaky):
    # x_ref: (BT, IHs, IWs, Ce)   space-to-depth'd bf16 input windows
    # w_ref: (KH*KW*Ce, Cout)     flat bf16 weight (tap-major K order)
    # b_ref: (1, Cout)            f32 bias
    # o_ref: (BT, OH*OW, Cout)    bf16 output
    x = x_ref[...]
    bt, _, _, ce = x.shape
    cout = w_ref.shape[-1]
    m = bt * OH * OW
    cols = []
    for i in range(KH):                       # static unroll over taps
        for j in range(KW):
            cols.append(x[:, i:i + OH, j:j + OW, :].reshape(m, ce))
    patch = cols[0] if len(cols) == 1 else jnp.concatenate(cols, axis=-1)
    acc = jnp.dot(patch, w_ref[...], preferred_element_type=jnp.float32)
    acc = _apply_act(acc + b_ref[...], leaky)
    o_ref[...] = acc.reshape(bt, OH * OW, cout).astype(o_ref.dtype)


def _space_to_depth(x, s):
    """(B,H,W,C) -> (B,H/s,W/s,s*s*C); turns a stride-s conv whose kernel is
    divisible by s into a unit-stride conv (no data duplication)."""
    if s == 1:
        return x
    B, H, W, C = x.shape
    x = x.reshape(B, H // s, s, W // s, s, C)
    x = jnp.transpose(x, (0, 1, 3, 2, 4, 5))
    return x.reshape(B, H // s, W // s, s * s * C)


def conv2d_act(x_nhwc, w_flat, bias2d, *, kh, kw, stride, leaky=False):
    """NHWC conv (VALID padding) + activation, PyTorch Conv2d semantics.

    x_nhwc : (B, H, W, Cin) bf16
    w_flat : (KH*KW*stride*stride*Cin, Cout) bf16 (tap-major K order)
    bias2d : (1, Cout) f32
    returns: (B, OH, OW, Cout) bf16
    """
    B, H, W, _ = x_nhwc.shape
    # All DQN layers satisfy kernel % stride == 0 (8/4, 4/2, 3/1).
    assert kh % stride == 0 and kw % stride == 0
    OH = (H - kh) // stride + 1
    OW = (W - kw) // stride + 1
    assert OH >= 1 and OW >= 1, "input too small for this conv stack"
    H_used = (OH - 1) * stride + kh
    W_used = (OW - 1) * stride + kw
    x = _space_to_depth(x_nhwc[:, :H_used, :W_used, :], stride)
    _, IHs, IWs, Ce = x.shape
    KH, KW = kh // stride, kw // stride
    K, Cout = w_flat.shape
    assert K == KH * KW * Ce, (K, KH, KW, Ce)

    BT = _pick_batch_tile(B, OH * OW)
    kernel = functools.partial(_conv_im2col_kernel,
                               KH=KH, KW=KW, OH=OH, OW=OW, leaky=leaky)
    out = pl.pallas_call(
        kernel,
        out_shape=jax.ShapeDtypeStruct((B, OH * OW, Cout), jnp.bfloat16),
        grid=(B // BT,),
        in_specs=[
            pl.BlockSpec((BT, IHs, IWs, Ce), lambda b: (b, 0, 0, 0)),
            pl.BlockSpec((K, Cout), lambda b: (0, 0)),      # resident weight
            pl.BlockSpec((1, Cout), lambda b: (0, 0)),      # resident bias
        ],
        out_specs=pl.BlockSpec((BT, OH * OW, Cout), lambda b: (b, 0, 0)),
        compiler_params=pltpu.CompilerParams(
            dimension_semantics=("parallel",),
            vmem_limit_bytes=_VMEM_LIMIT_BYTES),
    )(x, w_flat, bias2d)
    return out.reshape(B, OH, OW, Cout)


# ---------------------------------------------------------------------------
# Fused FC head kernel: q = relu(x @ W1 + b1) @ W2 + b2  (single launch)
# ---------------------------------------------------------------------------
def _fc_head_kernel(x_ref, w1_ref, b1_ref, w2_ref, b2_ref, o_ref, *, leaky):
    h = jnp.dot(x_ref[...], w1_ref[...], preferred_element_type=jnp.float32)
    h = _apply_act(h + b1_ref[...], leaky)
    q = jnp.dot(h.astype(w2_ref.dtype), w2_ref[...],
                preferred_element_type=jnp.float32)
    o_ref[...] = (q + b2_ref[...]).astype(o_ref.dtype)


def fc_head(x, w1, b1, w2, b2, *, leaky=False):
    """x: (B, K) bf16; w1: (K, H) bf16; w2: (H, Npad) bf16 -> (B, Npad) f32."""
    B, K = x.shape
    K1, Hd = w1.shape
    Hd2, Npad = w2.shape
    assert K == K1 and Hd == Hd2
    tm = _pick_row_tile(B)
    assert B % tm == 0
    kernel = functools.partial(_fc_head_kernel, leaky=leaky)
    return pl.pallas_call(
        kernel,
        out_shape=jax.ShapeDtypeStruct((B, Npad), jnp.float32),
        grid=(B // tm,),
        in_specs=[
            pl.BlockSpec((tm, K), lambda i: (i, 0)),
            pl.BlockSpec((K, Hd), lambda i: (0, 0)),
            pl.BlockSpec((1, Hd), lambda i: (0, 0)),
            pl.BlockSpec((Hd, Npad), lambda i: (0, 0)),
            pl.BlockSpec((1, Npad), lambda i: (0, 0)),
        ],
        out_specs=pl.BlockSpec((tm, Npad), lambda i: (i, 0)),
        compiler_params=pltpu.CompilerParams(
            dimension_semantics=("parallel",),
            vmem_limit_bytes=_VMEM_LIMIT_BYTES),
    )(x, w1, b1, w2, b2)


# ---------------------------------------------------------------------------
# Parameter init (PyTorch layouts) + one-time transform to kernel layouts
# ---------------------------------------------------------------------------
def _conv_out_hw(H, W):
    h1, w1 = (H - 8) // 4 + 1, (W - 8) // 4 + 1
    h2, w2 = (h1 - 4) // 2 + 1, (w1 - 4) // 2 + 1
    return (h2 - 3) + 1, (w2 - 3) + 1


def init_torch_params(key, input_shape, n_actions, channel_multiplier=1):
    """Deterministic params in PyTorch layouts (OIHW conv, (out,in) linear)."""
    c_in, H, W = input_shape
    cm = channel_multiplier
    c1, c2, c3 = 32 * cm, 64 * cm, 64 * cm
    h3, w3 = _conv_out_hw(H, W)
    feat = c3 * h3 * w3
    hidden = 512 * cm
    ks = jax.random.split(key, 10)

    def u(k, shape, fan_in):
        bound = 1.0 / jnp.sqrt(jnp.float32(fan_in))
        return jax.random.uniform(k, shape, jnp.float32, -bound, bound)

    return {
        "conv1_w": u(ks[0], (c1, c_in, 8, 8), c_in * 64),
        "conv1_b": u(ks[1], (c1,), c_in * 64),
        "conv2_w": u(ks[2], (c2, c1, 4, 4), c1 * 16),
        "conv2_b": u(ks[3], (c2,), c1 * 16),
        "conv3_w": u(ks[4], (c3, c2, 3, 3), c2 * 9),
        "conv3_b": u(ks[5], (c3,), c2 * 9),
        "fc1_w": u(ks[6], (hidden, feat), feat),
        "fc1_b": u(ks[7], (hidden,), feat),
        "fc2_w": u(ks[8], (n_actions, hidden), hidden),
        "fc2_b": u(ks[9], (n_actions,), hidden),
    }


def _prep_conv_weight(w_oihw, stride):
    """OIHW -> flat (KH*KW * stride^2 * Cin, Cout) bf16 matching the
    space-to-depth channel order and the kernel's tap concat order."""
    Cout, Cin, kh, kw = w_oihw.shape
    s = stride
    KH, KW = kh // s, kw // s
    w = w_oihw.reshape(Cout, Cin, KH, s, KW, s)          # (co,ci,qi,pi,qj,pj)
    w = jnp.transpose(w, (2, 4, 3, 5, 1, 0))             # (qi,qj,pi,pj,ci,co)
    return w.reshape(KH * KW * s * s * Cin, Cout).astype(jnp.bfloat16)


def _prep_bias(b):
    return b.reshape(1, -1).astype(jnp.float32)


def _prep_fc1_weight(w_fc1, c3, h3, w3):
    """Fold PyTorch's NCHW x.view(B,-1) flatten order into the fc1 weight so
    the NHWC flatten used by the kernels is equivalent (no zero rows)."""
    hidden, feat = w_fc1.shape
    assert feat == c3 * h3 * w3
    w = w_fc1.T.reshape(c3, h3, w3, hidden)              # rows in (c,h,w) order
    w = jnp.transpose(w, (1, 2, 0, 3))                   # -> (h,w,c) order
    return w.reshape(h3 * w3 * c3, hidden).astype(jnp.bfloat16)


def prepare_params(tp, input_shape, n_actions, channel_multiplier=1):
    c_in, H, W = input_shape
    cm = channel_multiplier
    c3 = 64 * cm
    h3, w3 = _conv_out_hw(H, W)
    hidden = 512 * cm
    n_act_pad = _round_up(n_actions)
    return {
        "w1": _prep_conv_weight(tp["conv1_w"], 4),
        "b1": _prep_bias(tp["conv1_b"]),
        "w2": _prep_conv_weight(tp["conv2_w"], 2),
        "b2": _prep_bias(tp["conv2_b"]),
        "w3": _prep_conv_weight(tp["conv3_w"], 1),
        "b3": _prep_bias(tp["conv3_b"]),
        "w_fc1": _prep_fc1_weight(tp["fc1_w"], c3, h3, w3),
        "b_fc1": tp["fc1_b"].reshape(1, hidden).astype(jnp.float32),
        "w_fc2": jnp.pad(tp["fc2_w"].T,
                         ((0, 0), (0, n_act_pad - n_actions))).astype(jnp.bfloat16),
        "b_fc2": jnp.pad(tp["fc2_b"],
                         (0, n_act_pad - n_actions)).reshape(1, n_act_pad).astype(jnp.float32),
    }


# ---------------------------------------------------------------------------
# Forward pass (equivalent of DQN.forward) + f32 reference for validation
# ---------------------------------------------------------------------------
@functools.partial(jax.jit, static_argnames=("n_actions", "leaky"))
def dqn_forward(params, x_nchw, n_actions, leaky=False):
    x = jnp.transpose(x_nchw, (0, 2, 3, 1)).astype(jnp.bfloat16)  # NHWC once
    x = conv2d_act(x, params["w1"], params["b1"], kh=8, kw=8, stride=4, leaky=leaky)
    x = conv2d_act(x, params["w2"], params["b2"], kh=4, kw=4, stride=2, leaky=leaky)
    x = conv2d_act(x, params["w3"], params["b3"], kh=3, kw=3, stride=1, leaky=leaky)
    B = x.shape[0]
    flat = x.reshape(B, -1)               # NHWC flatten; fc1 rows pre-permuted
    q = fc_head(flat, params["w_fc1"], params["b_fc1"],
                params["w_fc2"], params["b_fc2"], leaky=leaky)
    return q[:, :n_actions]

# TODO(synk): train_mario (replay sampling, Adam step, MSE backward) is a
#             training procedure, not part of the forward pass; not ported.


def dqn_forward_reference(tp, x_nchw, leaky=False):
    """Pure-JAX f32 reference with exact PyTorch semantics (NCHW)."""
    act = (lambda v: jnp.where(v > 0, v, 0.01 * v)) if leaky else (lambda v: jnp.maximum(v, 0.0))

    def conv(x, w, b, s):
        y = jax.lax.conv_general_dilated(
            x, w, (s, s), "VALID", dimension_numbers=("NCHW", "OIHW", "NCHW"))
        return act(y + b.reshape(1, -1, 1, 1))

    x = conv(x_nchw, tp["conv1_w"], tp["conv1_b"], 4)
    x = conv(x, tp["conv2_w"], tp["conv2_b"], 2)
    x = conv(x, tp["conv3_w"], tp["conv3_b"], 1)
    flat = x.reshape(x.shape[0], -1)
    h = act(flat @ tp["fc1_w"].T + tp["fc1_b"])
    return h @ tp["fc2_w"].T + tp["fc2_b"]


if __name__ == "__main__":
    # Smallest spatial size that survives the conv stack: 36 -> 8 -> 3 -> 1.
    input_shape = (4, 36, 36)
    batch, n_actions = 2, 6

    key = jax.random.PRNGKey(0)
    k_params, k_x = jax.random.split(key)
    torch_params = init_torch_params(k_params, input_shape, n_actions)
    params = prepare_params(torch_params, input_shape, n_actions)
    x = jax.random.normal(k_x, (batch,) + input_shape, dtype=jnp.float32)

    q = dqn_forward(params, x, n_actions=n_actions)
    jax.block_until_ready(q)
    assert q.shape == (batch, n_actions), q.shape

    # Validate against the f32 reference (bf16 MXU inputs -> loose tolerance).
    q_ref = dqn_forward_reference(torch_params, x)
    err = float(jnp.max(jnp.abs(q - q_ref)))
    scale = 1.0 + float(jnp.max(jnp.abs(q_ref)))
    assert err <= 5e-2 * scale, (err, scale)

    print("KERNEL_OK")
</pallas_src>

<mosaic_0001>
module attributes {stable_mosaic.version = 11 : i64} {
  func.func @_conv_im2col_kernel(%arg0: i32, %arg1: memref<2x9x9x64xbf16, #tpu.memory_space<vmem>>, %arg2: memref<256x32xbf16, #tpu.memory_space<vmem>>, %arg3: memref<1x32xf32, #tpu.memory_space<vmem>>, %arg4: memref<2x64x32xbf16, #tpu.memory_space<vmem>>) attributes {dimension_semantics = [#tpu.dimension_semantics<parallel>], iteration_bounds = array<i64: 1>, scalar_prefetch = 0 : i64, scratch_operands = 0 : i64, tpu.core_type = #tpu.core_type<tc>, window_params = [{transform_indices = @transform_0, window_bounds = array<i64: 2, 9, 9, 64>}, {pipeline_mode = #tpu.pipeline_mode<synchronous>, transform_indices = @transform_1, window_bounds = array<i64: 256, 32>}, {pipeline_mode = #tpu.pipeline_mode<synchronous>, transform_indices = @transform_2, window_bounds = array<i64: 1, 32>}, {transform_indices = @transform_3, window_bounds = array<i64: 2, 64, 32>}]} {
    %c0 = arith.constant 0 : index
    %c0_0 = arith.constant 0 : index
    %c0_1 = arith.constant 0 : index
    %c0_2 = arith.constant 0 : index
    %0 = vector.load %arg1[%c0, %c0_0, %c0_1, %c0_2] : memref<2x9x9x64xbf16, #tpu.memory_space<vmem>>, vector<2x9x9x64xbf16>
    %1 = vector.extract_strided_slice %0 {offsets = [0, 0, 0, 0], sizes = [2, 8, 8, 64], strides = [1, 1, 1, 1]} : vector<2x9x9x64xbf16> to vector<2x8x8x64xbf16>
    %2 = vector.shape_cast %1 : vector<2x8x8x64xbf16> to vector<128x64xbf16>
    %3 = vector.extract_strided_slice %0 {offsets = [0, 0, 1, 0], sizes = [2, 8, 8, 64], strides = [1, 1, 1, 1]} : vector<2x9x9x64xbf16> to vector<2x8x8x64xbf16>
    %4 = vector.shape_cast %3 : vector<2x8x8x64xbf16> to vector<128x64xbf16>
    %5 = vector.extract_strided_slice %0 {offsets = [0, 1, 0, 0], sizes = [2, 8, 8, 64], strides = [1, 1, 1, 1]} : vector<2x9x9x64xbf16> to vector<2x8x8x64xbf16>
    %6 = vector.shape_cast %5 : vector<2x8x8x64xbf16> to vector<128x64xbf16>
    %7 = vector.extract_strided_slice %0 {offsets = [0, 1, 1, 0], sizes = [2, 8, 8, 64], strides = [1, 1, 1, 1]} : vector<2x9x9x64xbf16> to vector<2x8x8x64xbf16>
    %8 = vector.shape_cast %7 : vector<2x8x8x64xbf16> to vector<128x64xbf16>
    %9 = tpu.concatenate %2, %4, %6, %8 in 1 : vector<128x64xbf16>, vector<128x64xbf16>, vector<128x64xbf16>, vector<128x64xbf16> -> vector<128x256xbf16>
    %c0_3 = arith.constant 0 : index
    %c0_4 = arith.constant 0 : index
    %10 = vector.load %arg2[%c0_3, %c0_4] : memref<256x32xbf16, #tpu.memory_space<vmem>>, vector<256x32xbf16>
    %cst = arith.constant dense<0.000000e+00> : vector<128x32xf32>
    %11 = tpu.matmul %9, %10, %cst {dimension_numbers = #tpu.dot_dimension_numbers<[1], [0], [0], [1], [0, 0, 1, 1], [], []>} : vector<128x256xbf16>, vector<256x32xbf16>, vector<128x32xf32> -> vector<128x32xf32>
    %c0_5 = arith.constant 0 : index
    %c0_6 = arith.constant 0 : index
    %12 = vector.load %arg3[%c0_5, %c0_6] : memref<1x32xf32, #tpu.memory_space<vmem>>, vector<1x32xf32>
    %13 = vector.broadcast %12 : vector<1x32xf32> to vector<128x32xf32>
    %14 = arith.addf %11, %13 : vector<128x32xf32>
    %cst_7 = arith.constant 0.000000e+00 : f32
    %15 = vector.broadcast %cst_7 : f32 to vector<128x32xf32>
    %16 = arith.maximumf %14, %15 : vector<128x32xf32>
    %17 = vector.shape_cast %16 : vector<128x32xf32> to vector<2x64x32xf32>
    %18 = arith.truncf %17 : vector<2x64x32xf32> to vector<2x64x32xbf16>
    %c0_8 = arith.constant 0 : index
    %c0_9 = arith.constant 0 : index
    %c0_10 = arith.constant 0 : index
    %19 = vector.load %arg4[%c0_8, %c0_9, %c0_10] : memref<2x64x32xbf16, #tpu.memory_space<vmem>>, vector<2x64x32xbf16>
    tpu.vector_store %arg4[%c0_8, %c0_9, %c0_10], %18 {strides = array<i32>} : memref<2x64x32xbf16, #tpu.memory_space<vmem>>, vector<2x64x32xbf16>,
    return
  }
  func.func @transform_0(%arg0: i32) -> (i32, i32, i32, i32) {
    %c0_i32 = arith.constant 0 : i32
    %c0_i32_0 = arith.constant 0 : i32
    %c0_i32_1 = arith.constant 0 : i32
    %c0_i32_2 = arith.constant 0 : i32
    return %arg0, %c0_i32, %c0_i32_0, %c0_i32_1 : i32, i32, i32, i32
  }
  func.func @transform_1(%arg0: i32) -> (i32, i32) {
    %c0_i32 = arith.constant 0 : i32
    %c0_i32_0 = arith.constant 0 : i32
    %c0_i32_1 = arith.constant 0 : i32
    return %c0_i32, %c0_i32_0 : i32, i32
  }
  func.func @transform_2(%arg0: i32) -> (i32, i32) {
    %c0_i32 = arith.constant 0 : i32
    %c0_i32_0 = arith.constant 0 : i32
    %c0_i32_1 = arith.constant 0 : i32
    return %c0_i32, %c0_i32_0 : i32, i32
  }
  func.func @transform_3(%arg0: i32) -> (i32, i32, i32) {
    %c0_i32 = arith.constant 0 : i32
    %c0_i32_0 = arith.constant 0 : i32
    %c0_i32_1 = arith.constant 0 : i32
    return %arg0, %c0_i32, %c0_i32_0 : i32, i32, i32
  }
}

module attributes {stable_mosaic.version = 11 : i64} {
  func.func @_conv_im2col_kernel(%arg0: i32, %arg1: memref<2x4x4x128xbf16, #tpu.memory_space<vmem>>, %arg2: memref<512x64xbf16, #tpu.memory_space<vmem>>, %arg3: memref<1x64xf32, #tpu.memory_space<vmem>>, %arg4: memref<2x9x64xbf16, #tpu.memory_space<vmem>>) attributes {dimension_semantics = [#tpu.dimension_semantics<parallel>], iteration_bounds = array<i64: 1>, scalar_prefetch = 0 : i64, scratch_operands = 0 : i64, tpu.core_type = #tpu.core_type<tc>, window_params = [{transform_indices = @transform_0, window_bounds = array<i64: 2, 4, 4, 128>}, {pipeline_mode = #tpu.pipeline_mode<synchronous>, transform_indices = @transform_1, window_bounds = array<i64: 512, 64>}, {pipeline_mode = #tpu.pipeline_mode<synchronous>, transform_indices = @transform_2, window_bounds = array<i64: 1, 64>}, {transform_indices = @transform_3, window_bounds = array<i64: 2, 9, 64>}]} {
    %c0 = arith.constant 0 : index
    %c0_0 = arith.constant 0 : index
    %c0_1 = arith.constant 0 : index
    %c0_2 = arith.constant 0 : index
    %0 = vector.load %arg1[%c0, %c0_0, %c0_1, %c0_2] : memref<2x4x4x128xbf16, #tpu.memory_space<vmem>>, vector<2x4x4x128xbf16>
    %1 = vector.extract_strided_slice %0 {offsets = [0, 0, 0, 0], sizes = [2, 3, 3, 128], strides = [1, 1, 1, 1]} : vector<2x4x4x128xbf16> to vector<2x3x3x128xbf16>
    %2 = vector.shape_cast %1 : vector<2x3x3x128xbf16> to vector<18x128xbf16>
    %3 = vector.extract_strided_slice %0 {offsets = [0, 0, 1, 0], sizes = [2, 3, 3, 128], strides = [1, 1, 1, 1]} : vector<2x4x4x128xbf16> to vector<2x3x3x128xbf16>
    %4 = vector.shape_cast %3 : vector<2x3x3x128xbf16> to vector<18x128xbf16>
    %5 = vector.extract_strided_slice %0 {offsets = [0, 1, 0, 0], sizes = [2, 3, 3, 128], strides = [1, 1, 1, 1]} : vector<2x4x4x128xbf16> to vector<2x3x3x128xbf16>
    %6 = vector.shape_cast %5 : vector<2x3x3x128xbf16> to vector<18x128xbf16>
    %7 = vector.extract_strided_slice %0 {offsets = [0, 1, 1, 0], sizes = [2, 3, 3, 128], strides = [1, 1, 1, 1]} : vector<2x4x4x128xbf16> to vector<2x3x3x128xbf16>
    %8 = vector.shape_cast %7 : vector<2x3x3x128xbf16> to vector<18x128xbf16>
    %9 = tpu.concatenate %2, %4, %6, %8 in 1 : vector<18x128xbf16>, vector<18x128xbf16>, vector<18x128xbf16>, vector<18x128xbf16> -> vector<18x512xbf16>
    %c0_3 = arith.constant 0 : index
    %c0_4 = arith.constant 0 : index
    %10 = vector.load %arg2[%c0_3, %c0_4] : memref<512x64xbf16, #tpu.memory_space<vmem>>, vector<512x64xbf16>
    %cst = arith.constant dense<0.000000e+00> : vector<18x64xf32>
    %11 = tpu.matmul %9, %10, %cst {dimension_numbers = #tpu.dot_dimension_numbers<[1], [0], [0], [1], [0, 0, 1, 1], [], []>} : vector<18x512xbf16>, vector<512x64xbf16>, vector<18x64xf32> -> vector<18x64xf32>
    %c0_5 = arith.constant 0 : index
    %c0_6 = arith.constant 0 : index
    %12 = vector.load %arg3[%c0_5, %c0_6] : memref<1x64xf32, #tpu.memory_space<vmem>>, vector<1x64xf32>
    %13 = vector.broadcast %12 : vector<1x64xf32> to vector<18x64xf32>
    %14 = arith.addf %11, %13 : vector<18x64xf32>
    %cst_7 = arith.constant 0.000000e+00 : f32
    %15 = vector.broadcast %cst_7 : f32 to vector<18x64xf32>
    %16 = arith.maximumf %14, %15 : vector<18x64xf32>
    %17 = vector.shape_cast %16 : vector<18x64xf32> to vector<2x9x64xf32>
    %18 = arith.truncf %17 : vector<2x9x64xf32> to vector<2x9x64xbf16>
    %c0_8 = arith.constant 0 : index
    %c0_9 = arith.constant 0 : index
    %c0_10 = arith.constant 0 : index
    %19 = vector.load %arg4[%c0_8, %c0_9, %c0_10] : memref<2x9x64xbf16, #tpu.memory_space<vmem>>, vector<2x9x64xbf16>
    tpu.vector_store %arg4[%c0_8, %c0_9, %c0_10], %18 {strides = array<i32>} : memref<2x9x64xbf16, #tpu.memory_space<vmem>>, vector<2x9x64xbf16>,
    return
  }
  func.func @transform_0(%arg0: i32) -> (i32, i32, i32, i32) {
    %c0_i32 = arith.constant 0 : i32
    %c0_i32_0 = arith.constant 0 : i32
    %c0_i32_1 = arith.constant 0 : i32
    %c0_i32_2 = arith.constant 0 : i32
    return %arg0, %c0_i32, %c0_i32_0, %c0_i32_1 : i32, i32, i32, i32
  }
  func.func @transform_1(%arg0: i32) -> (i32, i32) {
    %c0_i32 = arith.constant 0 : i32
    %c0_i32_0 = arith.constant 0 : i32
    %c0_i32_1 = arith.constant 0 : i32
    return %c0_i32, %c0_i32_0 : i32, i32
  }
  func.func @transform_2(%arg0: i32) -> (i32, i32) {
    %c0_i32 = arith.constant 0 : i32
    %c0_i32_0 = arith.constant 0 : i32
    %c0_i32_1 = arith.constant 0 : i32
    return %c0_i32, %c0_i32_0 : i32, i32
  }
  func.func @transform_3(%arg0: i32) -> (i32, i32, i32) {
    %c0_i32 = arith.constant 0 : i32
    %c0_i32_0 = arith.constant 0 : i32
    %c0_i32_1 = arith.constant 0 : i32
    return %arg0, %c0_i32, %c0_i32_0 : i32, i32, i32
  }
}

module attributes {stable_mosaic.version = 11 : i64} {
  func.func @_fc_head_kernel(%arg0: i32, %arg1: memref<2x64xbf16, #tpu.memory_space<vmem>>, %arg2: memref<64x512xbf16, #tpu.memory_space<vmem>>, %arg3: memref<1x512xf32, #tpu.memory_space<vmem>>, %arg4: memref<512x128xbf16, #tpu.memory_space<vmem>>, %arg5: memref<1x128xf32, #tpu.memory_space<vmem>>, %arg6: memref<2x128xf32, #tpu.memory_space<vmem>>) attributes {dimension_semantics = [#tpu.dimension_semantics<parallel>], iteration_bounds = array<i64: 1>, scalar_prefetch = 0 : i64, scratch_operands = 0 : i64, tpu.core_type = #tpu.core_type<tc>, window_params = [{transform_indices = @transform_0, window_bounds = array<i64: 2, 64>}, {pipeline_mode = #tpu.pipeline_mode<synchronous>, transform_indices = @transform_1, window_bounds = array<i64: 64, 512>}, {pipeline_mode = #tpu.pipeline_mode<synchronous>, transform_indices = @transform_2, window_bounds = array<i64: 1, 512>}, {pipeline_mode = #tpu.pipeline_mode<synchronous>, transform_indices = @transform_3, window_bounds = array<i64: 512, 128>}, {pipeline_mode = #tpu.pipeline_mode<synchronous>, transform_indices = @transform_4, window_bounds = array<i64: 1, 128>}, {transform_indices = @transform_5, window_bounds = array<i64: 2, 128>}]} {
    %c0 = arith.constant 0 : index
    %c0_0 = arith.constant 0 : index
    %0 = vector.load %arg1[%c0, %c0_0] : memref<2x64xbf16, #tpu.memory_space<vmem>>, vector<2x64xbf16>
    %c0_1 = arith.constant 0 : index
    %c0_2 = arith.constant 0 : index
    %1 = vector.load %arg2[%c0_1, %c0_2] : memref<64x512xbf16, #tpu.memory_space<vmem>>, vector<64x512xbf16>
    %cst = arith.constant dense<0.000000e+00> : vector<2x512xf32>
    %2 = tpu.matmul %0, %1, %cst {dimension_numbers = #tpu.dot_dimension_numbers<[1], [0], [0], [1], [0, 0, 1, 1], [], []>} : vector<2x64xbf16>, vector<64x512xbf16>, vector<2x512xf32> -> vector<2x512xf32>
    %c0_3 = arith.constant 0 : index
    %c0_4 = arith.constant 0 : index
    %3 = vector.load %arg3[%c0_3, %c0_4] : memref<1x512xf32, #tpu.memory_space<vmem>>, vector<1x512xf32>
    %4 = vector.broadcast %3 : vector<1x512xf32> to vector<2x512xf32>
    %5 = arith.addf %2, %4 : vector<2x512xf32>
    %cst_5 = arith.constant 0.000000e+00 : f32
    %6 = vector.broadcast %cst_5 : f32 to vector<2x512xf32>
    %7 = arith.maximumf %5, %6 : vector<2x512xf32>
    %8 = arith.truncf %7 : vector<2x512xf32> to vector<2x512xbf16>
    %c0_6 = arith.constant 0 : index
    %c0_7 = arith.constant 0 : index
    %9 = vector.load %arg4[%c0_6, %c0_7] : memref<512x128xbf16, #tpu.memory_space<vmem>>, vector<512x128xbf16>
    %cst_8 = arith.constant dense<0.000000e+00> : vector<2x128xf32>
    %10 = tpu.matmul %8, %9, %cst_8 {dimension_numbers = #tpu.dot_dimension_numbers<[1], [0], [0], [1], [0, 0, 1, 1], [], []>} : vector<2x512xbf16>, vector<512x128xbf16>, vector<2x128xf32> -> vector<2x128xf32>
    %c0_9 = arith.constant 0 : index
    %c0_10 = arith.constant 0 : index
    %11 = vector.load %arg5[%c0_9, %c0_10] : memref<1x128xf32, #tpu.memory_space<vmem>>, vector<1x128xf32>
    %12 = vector.broadcast %11 : vector<1x128xf32> to vector<2x128xf32>
    %13 = arith.addf %10, %12 : vector<2x128xf32>
    %c0_11 = arith.constant 0 : index
    %c0_12 = arith.constant 0 : index
    %14 = vector.load %arg6[%c0_11, %c0_12] : memref<2x128xf32, #tpu.memory_space<vmem>>, vector<2x128xf32>
    tpu.vector_store %arg6[%c0_11, %c0_12], %13 {strides = array<i32>} : memref<2x128xf32, #tpu.memory_space<vmem>>, vector<2x128xf32>,
    return
  }
  func.func @transform_0(%arg0: i32) -> (i32, i32) {
    %c0_i32 = arith.constant 0 : i32
    %c0_i32_0 = arith.constant 0 : i32
    return %arg0, %c0_i32 : i32, i32
  }
  func.func @transform_1(%arg0: i32) -> (i32, i32) {
    %c0_i32 = arith.constant 0 : i32
    %c0_i32_0 = arith.constant 0 : i32
    %c0_i32_1 = arith.constant 0 : i32
    return %c0_i32, %c0_i32_0 : i32, i32
  }
  func.func @transform_2(%arg0: i32) -> (i32, i32) {
    %c0_i32 = arith.constant 0 : i32
    %c0_i32_0 = arith.constant 0 : i32
    %c0_i32_1 = arith.constant 0 : i32
    return %c0_i32, %c0_i32_0 : i32, i32
  }
  func.func @transform_3(%arg0: i32) -> (i32, i32) {
    %c0_i32 = arith.constant 0 : i32
    %c0_i32_0 = arith.constant 0 : i32
    %c0_i32_1 = arith.constant 0 : i32
    return %c0_i32, %c0_i32_0 : i32, i32
  }
  func.func @transform_4(%arg0: i32) -> (i32, i32) {
    %c0_i32 = arith.constant 0 : i32
    %c0_i32_0 = arith.constant 0 : i32
    %c0_i32_1 = arith.constant 0 : i32
    return %c0_i32, %c0_i32_0 : i32, i32
  }
  func.func @transform_5(%arg0: i32) -> (i32, i32) {
    %c0_i32 = arith.constant 0 : i32
    %c0_i32_0 = arith.constant 0 : i32
    return %arg0, %c0_i32 : i32, i32
  }
}

module attributes {stable_mosaic.version = 11 : i64} {
  func.func @_conv_im2col_kernel(%arg0: i32, %arg1: memref<2x3x3x64xbf16, #tpu.memory_space<vmem>>, %arg2: memref<576x64xbf16, #tpu.memory_space<vmem>>, %arg3: memref<1x64xf32, #tpu.memory_space<vmem>>, %arg4: memref<2x1x64xbf16, #tpu.memory_space<vmem>>) attributes {dimension_semantics = [#tpu.dimension_semantics<parallel>], iteration_bounds = array<i64: 1>, scalar_prefetch = 0 : i64, scratch_operands = 0 : i64, tpu.core_type = #tpu.core_type<tc>, window_params = [{transform_indices = @transform_0, window_bounds = array<i64: 2, 3, 3, 64>}, {pipeline_mode = #tpu.pipeline_mode<synchronous>, transform_indices = @transform_1, window_bounds = array<i64: 576, 64>}, {pipeline_mode = #tpu.pipeline_mode<synchronous>, transform_indices = @transform_2, window_bounds = array<i64: 1, 64>}, {transform_indices = @transform_3, window_bounds = array<i64: 2, 1, 64>}]} {
    %c0 = arith.constant 0 : index
    %c0_0 = arith.constant 0 : index
    %c0_1 = arith.constant 0 : index
    %c0_2 = arith.constant 0 : index
    %0 = vector.load %arg1[%c0, %c0_0, %c0_1, %c0_2] : memref<2x3x3x64xbf16, #tpu.memory_space<vmem>>, vector<2x3x3x64xbf16>
    %1 = vector.extract_strided_slice %0 {offsets = [0, 0, 0, 0], sizes = [2, 1, 1, 64], strides = [1, 1, 1, 1]} : vector<2x3x3x64xbf16> to vector<2x1x1x64xbf16>
    %2 = vector.shape_cast %1 : vector<2x1x1x64xbf16> to vector<2x64xbf16>
    %3 = vector.extract_strided_slice %0 {offsets = [0, 0, 1, 0], sizes = [2, 1, 1, 64], strides = [1, 1, 1, 1]} : vector<2x3x3x64xbf16> to vector<2x1x1x64xbf16>
    %4 = vector.shape_cast %3 : vector<2x1x1x64xbf16> to vector<2x64xbf16>
    %5 = vector.extract_strided_slice %0 {offsets = [0, 0, 2, 0], sizes = [2, 1, 1, 64], strides = [1, 1, 1, 1]} : vector<2x3x3x64xbf16> to vector<2x1x1x64xbf16>
    %6 = vector.shape_cast %5 : vector<2x1x1x64xbf16> to vector<2x64xbf16>
    %7 = vector.extract_strided_slice %0 {offsets = [0, 1, 0, 0], sizes = [2, 1, 1, 64], strides = [1, 1, 1, 1]} : vector<2x3x3x64xbf16> to vector<2x1x1x64xbf16>
    %8 = vector.shape_cast %7 : vector<2x1x1x64xbf16> to vector<2x64xbf16>
    %9 = vector.extract_strided_slice %0 {offsets = [0, 1, 1, 0], sizes = [2, 1, 1, 64], strides = [1, 1, 1, 1]} : vector<2x3x3x64xbf16> to vector<2x1x1x64xbf16>
    %10 = vector.shape_cast %9 : vector<2x1x1x64xbf16> to vector<2x64xbf16>
    %11 = vector.extract_strided_slice %0 {offsets = [0, 1, 2, 0], sizes = [2, 1, 1, 64], strides = [1, 1, 1, 1]} : vector<2x3x3x64xbf16> to vector<2x1x1x64xbf16>
    %12 = vector.shape_cast %11 : vector<2x1x1x64xbf16> to vector<2x64xbf16>
    %13 = vector.extract_strided_slice %0 {offsets = [0, 2, 0, 0], sizes = [2, 1, 1, 64], strides = [1, 1, 1, 1]} : vector<2x3x3x64xbf16> to vector<2x1x1x64xbf16>
    %14 = vector.shape_cast %13 : vector<2x1x1x64xbf16> to vector<2x64xbf16>
    %15 = vector.extract_strided_slice %0 {offsets = [0, 2, 1, 0], sizes = [2, 1, 1, 64], strides = [1, 1, 1, 1]} : vector<2x3x3x64xbf16> to vector<2x1x1x64xbf16>
    %16 = vector.shape_cast %15 : vector<2x1x1x64xbf16> to vector<2x64xbf16>
    %17 = vector.extract_strided_slice %0 {offsets = [0, 2, 2, 0], sizes = [2, 1, 1, 64], strides = [1, 1, 1, 1]} : vector<2x3x3x64xbf16> to vector<2x1x1x64xbf16>
    %18 = vector.shape_cast %17 : vector<2x1x1x64xbf16> to vector<2x64xbf16>
    %19 = tpu.concatenate %2, %4, %6, %8, %10, %12, %14, %16, %18 in 1 : vector<2x64xbf16>, vector<2x64xbf16>, vector<2x64xbf16>, vector<2x64xbf16>, vector<2x64xbf16>, vector<2x64xbf16>, vector<2x64xbf16>, vector<2x64xbf16>, vector<2x64xbf16> -> vector<2x576xbf16>
    %c0_3 = arith.constant 0 : index
    %c0_4 = arith.constant 0 : index
    %20 = vector.load %arg2[%c0_3, %c0_4] : memref<576x64xbf16, #tpu.memory_space<vmem>>, vector<576x64xbf16>
    %cst = arith.constant dense<0.000000e+00> : vector<2x64xf32>
    %21 = tpu.matmul %19, %20, %cst {dimension_numbers = #tpu.dot_dimension_numbers<[1], [0], [0], [1], [0, 0, 1, 1], [], []>} : vector<2x576xbf16>, vector<576x64xbf16>, vector<2x64xf32> -> vector<2x64xf32>
    %c0_5 = arith.constant 0 : index
    %c0_6 = arith.constant 0 : index
    %22 = vector.load %arg3[%c0_5, %c0_6] : memref<1x64xf32, #tpu.memory_space<vmem>>, vector<1x64xf32>
    %23 = vector.broadcast %22 : vector<1x64xf32> to vector<2x64xf32>
    %24 = arith.addf %21, %23 : vector<2x64xf32>
    %cst_7 = arith.constant 0.000000e+00 : f32
    %25 = vector.broadcast %cst_7 : f32 to vector<2x64xf32>
    %26 = arith.maximumf %24, %25 : vector<2x64xf32>
    %27 = vector.shape_cast %26 : vector<2x64xf32> to vector<2x1x64xf32>
    %28 = arith.truncf %27 : vector<2x1x64xf32> to vector<2x1x64xbf16>
    %c0_8 = arith.constant 0 : index
    %c0_9 = arith.constant 0 : index
    %c0_10 = arith.constant 0 : index
    %29 = vector.load %arg4[%c0_8, %c0_9, %c0_10] : memref<2x1x64xbf16, #tpu.memory_space<vmem>>, vector<2x1x64xbf16>
    tpu.vector_store %arg4[%c0_8, %c0_9, %c0_10], %28 {strides = array<i32>} : memref<2x1x64xbf16, #tpu.memory_space<vmem>>, vector<2x1x64xbf16>,
    return
  }
  func.func @transform_0(%arg0: i32) -> (i32, i32, i32, i32) {
    %c0_i32 = arith.constant 0 : i32
    %c0_i32_0 = arith.constant 0 : i32
    %c0_i32_1 = arith.constant 0 : i32
    %c0_i32_2 = arith.constant 0 : i32
    return %arg0, %c0_i32, %c0_i32_0, %c0_i32_1 : i32, i32, i32, i32
  }
  func.func @transform_1(%arg0: i32) -> (i32, i32) {
    %c0_i32 = arith.constant 0 : i32
    %c0_i32_0 = arith.constant 0 : i32
    %c0_i32_1 = arith.constant 0 : i32
    return %c0_i32, %c0_i32_0 : i32, i32
  }
  func.func @transform_2(%arg0: i32) -> (i32, i32) {
    %c0_i32 = arith.constant 0 : i32
    %c0_i32_0 = arith.constant 0 : i32
    %c0_i32_1 = arith.constant 0 : i32
    return %c0_i32, %c0_i32_0 : i32, i32
  }
  func.func @transform_3(%arg0: i32) -> (i32, i32, i32) {
    %c0_i32 = arith.constant 0 : i32
    %c0_i32_0 = arith.constant 0 : i32
    %c0_i32_1 = arith.constant 0 : i32
    return %arg0, %c0_i32, %c0_i32_0 : i32, i32, i32
  }
}

</mosaic_0001>

<llo_original>
// kernel: dqn_forward.4
$region0: #{dqn_forward.4}
  #allocation0 [shape = 'u32[]', space=smem, size = 0x4, offset = 0x4, fixed_abs, tag = 'smem constant byte address 0x4 - core index']
  #allocation1 [shape = 'u32[72,128]{1,0:T(1,128)}', space=vmem, size = 0x9000, scoped, tag = 'internal scratch']
  %s0 = inlined_call_operand.vmem [shape: bf16[2,9,9,64], index: 0, kind: input, shape index: {}]
  %s1 = inlined_call_operand.vmem [shape: bf16[256,32], index: 1, kind: input, shape index: {}]
  %s2 = inlined_call_operand.vmem [shape: f32[1,32], index: 2, kind: input, shape index: {}]
  %s3 = inlined_call_operand.vmem [shape: bf16[2,64,32], index: 3, kind: output, shape index: {}]
  %s4 = sld [smem:[#allocation0]]
  $region22: #{dqn_forward.4} parent=0
    _
  %s6 = ssub.s32 1, %s4
  %s7 = scalar_select 0, %s6, %s4
  // Predicated region
  $region2: #{dqn_forward.4} parent=0 // pred_check
    _
  $region3: #{dqn_forward.4} parent=0 // pred_check_branch
    %9 = sbr.rel (0) target = $region5
  $region4: #{dqn_forward.4} parent=0 // pred_region
    _
  $region5: #{dqn_forward.4} parent=0 // pred_fallthru
    _
  // Predicated region
  $region6: #{dqn_forward.4} parent=0 // pred_check
    _
  $region7: #{dqn_forward.4} parent=0 // pred_check_branch
    %11 = sbr.rel (0) target = $region9
  $region8: #{dqn_forward.4} parent=0 // pred_region
    _
  $region9: #{dqn_forward.4} parent=0 // pred_fallthru
    _
  // Predicated region
  $region10: #{dqn_forward.4} parent=0 // pred_check
    _
  $region11: #{dqn_forward.4} parent=0 // pred_check_branch
    %13 = sbr.rel (0) target = $region13
  $region12: #{dqn_forward.4} parent=0 // pred_region
    _
  $region13: #{dqn_forward.4} parent=0 // pred_fallthru
    _
  %v14 = vld [vmem:[%s0] sm:$0xf]
  %v15 = vld [vmem:[%s0 + $0x4] sm:$0x1]
  %v16 = vld [vmem:[%s0 + $0x8] sm:$0xf]
  %v17 = vld [vmem:[%s0 + $0xc] sm:$0x1]
  %v18 = vld [vmem:[%s0 + $0x10] sm:$0xf]
  %v19 = vld [vmem:[%s0 + $0x14] sm:$0x1]
  %v20 = vld [vmem:[%s0 + $0x18] sm:$0xf]
  %v21 = vld [vmem:[%s0 + $0x1c] sm:$0x1]
  %v22 = vld [vmem:[%s0 + $0x20] sm:$0xf]
  %v23 = vld [vmem:[%s0 + $0x24] sm:$0x1]
  %v24 = vld [vmem:[%s0 + $0x28] sm:$0xf]
  %v25 = vld [vmem:[%s0 + $0x2c] sm:$0x1]
  %v26 = vld [vmem:[%s0 + $0x30] sm:$0xf]
  %v27 = vld [vmem:[%s0 + $0x34] sm:$0x1]
  %v28 = vld [vmem:[%s0 + $0x38] sm:$0xf]
  %v29 = vld [vmem:[%s0 + $0x3c] sm:$0x1]
  %v30 = vld [vmem:[%s0 + $0x40] sm:$0xf]
  %v31 = vld [vmem:[%s0 + $0x44] sm:$0x1]
  %v32 = vld [vmem:[%s0 + $0x48] sm:$0xf]
  %v33 = vld [vmem:[%s0 + $0x4c] sm:$0x1]
  %v34 = vld [vmem:[%s0 + $0x50] sm:$0xf]
  %v35 = vld [vmem:[%s0 + $0x54] sm:$0x1]
  %v36 = vld [vmem:[%s0 + $0x58] sm:$0xf]
  %v37 = vld [vmem:[%s0 + $0x5c] sm:$0x1]
  %v38 = vld [vmem:[%s0 + $0x60] sm:$0xf]
  %v39 = vld [vmem:[%s0 + $0x64] sm:$0x1]
  %v40 = vld [vmem:[%s0 + $0x68] sm:$0xf]
  %v41 = vld [vmem:[%s0 + $0x6c] sm:$0x1]
  %v42 = vld [vmem:[%s0 + $0x70] sm:$0xf]
  %v43 = vld [vmem:[%s0 + $0x74] sm:$0x1]
  %v44 = vld [vmem:[%s0 + $0x78] sm:$0xf]
  %v45 = vld [vmem:[%s0 + $0x7c] sm:$0x1]
  %v46 = vld [vmem:[%s0 + $0x80] sm:$0xf]
  %v47 = vld [vmem:[%s0 + $0x84] sm:$0x1]
  %v48 = vld [vmem:[%s0 + $0x88] sm:$0xf]
  %v49 = vld [vmem:[%s0 + $0x8c] sm:$0x1]
  %vm50 = vsmask.f32 3328
  %vm51 = vsmask.f32 7440
  %vm52 = vmor %vm50, %vm51
  %v54 = vshrl.u32 %v14, 16
  %v56 = vrot.slane %v54, 4
  %v57 = vshll.u32 %v14, 16
  %v59 = vrot.slane %v57, 5
  %v60 = vor.u32 %v56, %v59
  %v61 = vrot.slane %v60, 4
  %v63 = vshll.u32 %v15, 16
  %v65 = vrot.slane %v63, 5
  %v66 = vsel %vm52, %v61, %v65
  %v68 = vshrl.u32 %v16, 16
  %v70 = vrot.slane %v68, 4
  %v71 = vshll.u32 %v16, 16
  %v73 = vrot.slane %v71, 5
  %v74 = vor.u32 %v70, %v73
  %v75 = vrot.slane %v74, 4
  %v77 = vshll.u32 %v17, 16
  %v79 = vrot.slane %v77, 5
  %v80 = vsel %vm52, %v75, %v79
  %v82 = vshrl.u32 %v18, 16
  %v84 = vrot.slane %v82, 4
  %v85 = vshll.u32 %v18, 16
  %v87 = vrot.slane %v85, 5
  %v88 = vor.u32 %v84, %v87
  %v89 = vrot.slane %v88, 4
  %v91 = vshll.u32 %v19, 16
  %v93 = vrot.slane %v91, 5
  %v94 = vsel %vm52, %v89, %v93
  %v96 = vshrl.u32 %v20, 16
  %v98 = vrot.slane %v96, 4
  %v99 = vshll.u32 %v20, 16
  %v101 = vrot.slane %v99, 5
  %v102 = vor.u32 %v98, %v101
  %v103 = vrot.slane %v102, 4
  %v105 = vshll.u32 %v21, 16
  %v107 = vrot.slane %v105, 5
  %v108 = vsel %vm52, %v103, %v107
  %v110 = vshrl.u32 %v22, 16
  %v112 = vrot.slane %v110, 4
  %v113 = vshll.u32 %v22, 16
  %v115 = vrot.slane %v113, 5
  %v116 = vor.u32 %v112, %v115
  %v117 = vrot.slane %v116, 4
  %v119 = vshll.u32 %v23, 16
  %v121 = vrot.slane %v119, 5
  %v122 = vsel %vm52, %v117, %v121
  %v124 = vshrl.u32 %v24, 16
  %v126 = vrot.slane %v124, 4
  %v127 = vshll.u32 %v24, 16
  %v129 = vrot.slane %v127, 5
  %v130 = vor.u32 %v126, %v129
  %v131 = vrot.slane %v130, 4
  %v133 = vshll.u32 %v25, 16
  %v135 = vrot.slane %v133, 5
  %v136 = vsel %vm52, %v131, %v135
  %v138 = vshrl.u32 %v26, 16
  %v140 = vrot.slane %v138, 4
  %v141 = vshll.u32 %v26, 16
  %v143 = vrot.slane %v141, 5
  %v144 = vor.u32 %v140, %v143
  %v145 = vrot.slane %v144, 4
  %v147 = vshll.u32 %v27, 16
  %v149 = vrot.slane %v147, 5
  %v150 = vsel %vm52, %v145, %v149
  %v152 = vshrl.u32 %v28, 16
  %v154 = vrot.slane %v152, 4
  %v155 = vshll.u32 %v28, 16
  %v157 = vrot.slane %v155, 5
  %v158 = vor.u32 %v154, %v157
  %v159 = vrot.slane %v158, 4
  %v161 = vshll.u32 %v29, 16
  %v163 = vrot.slane %v161, 5
  %v164 = vsel %vm52, %v159, %v163
  %v166 = vshrl.u32 %v32, 16
  %v168 = vrot.slane %v166, 4
  %v169 = vshll.u32 %v32, 16
  %v171 = vrot.slane %v169, 5
  %v172 = vor.u32 %v168, %v171
  %v173 = vrot.slane %v172, 4
  %v175 = vshll.u32 %v33, 16
  %v177 = vrot.slane %v175, 5
  %v178 = vsel %vm52, %v173, %v177
  %v180 = vshrl.u32 %v34, 16
  %v182 = vrot.slane %v180, 4
  %v183 = vshll.u32 %v34, 16
  %v185 = vrot.slane %v183, 5
  %v186 = vor.u32 %v182, %v185
  %v187 = vrot.slane %v186, 4
  %v189 = vshll.u32 %v35, 16
  %v191 = vrot.slane %v189, 5
  %v192 = vsel %vm52, %v187, %v191
  %v194 = vshrl.u32 %v36, 16
  %v196 = vrot.slane %v194, 4
  %v197 = vshll.u32 %v36, 16
  %v199 = vrot.slane %v197, 5
  %v200 = vor.u32 %v196, %v199
  %v201 = vrot.slane %v200, 4
  %v203 = vshll.u32 %v37, 16
  %v205 = vrot.slane %v203, 5
  %v206 = vsel %vm52, %v201, %v205
  %v208 = vshrl.u32 %v38, 16
  %v210 = vrot.slane %v208, 4
  %v211 = vshll.u32 %v38, 16
  %v213 = vrot.slane %v211, 5
  %v214 = vor.u32 %v210, %v213
  %v215 = vrot.slane %v214, 4
  %v217 = vshll.u32 %v39, 16
  %v219 = vrot.slane %v217, 5
  %v220 = vsel %vm52, %v215, %v219
  %v222 = vshrl.u32 %v40, 16
  %v224 = vrot.slane %v222, 4
  %v225 = vshll.u32 %v40, 16
  %v227 = vrot.slane %v225, 5
  %v228 = vor.u32 %v224, %v227
  %v229 = vrot.slane %v228, 4
  %v231 = vshll.u32 %v41, 16
  %v233 = vrot.slane %v231, 5
  %v234 = vsel %vm52, %v229, %v233
  %v236 = vshrl.u32 %v42, 16
  %v238 = vrot.slane %v236, 4
  %v239 = vshll.u32 %v42, 16
  %v241 = vrot.slane %v239, 5
  %v242 = vor.u32 %v238, %v241
  %v243 = vrot.slane %v242, 4
  %v245 = vshll.u32 %v43, 16
  %v247 = vrot.slane %v245, 5
  %v248 = vsel %vm52, %v243, %v247
  %v250 = vshrl.u32 %v44, 16
  %v252 = vrot.slane %v250, 4
  %v253 = vshll.u32 %v44, 16
  %v255 = vrot.slane %v253, 5
  %v256 = vor.u32 %v252, %v255
  %v257 = vrot.slane %v256, 4
  %v259 = vshll.u32 %v45, 16
  %v261 = vrot.slane %v259, 5
  %v262 = vsel %vm52, %v257, %v261
  %v264 = vshrl.u32 %v46, 16
  %v266 = vrot.slane %v264, 4
  %v267 = vshll.u32 %v46, 16
  %v269 = vrot.slane %v267, 5
  %v270 = vor.u32 %v266, %v269
  %v271 = vrot.slane %v270, 4
  %v273 = vshll.u32 %v47, 16
  %v275 = vrot.slane %v273, 5
  %v276 = vsel %vm52, %v271, %v275
  %v278 = vshrl.u32 %v30, 16
  %v280 = vrot.slane %v278, 4
  %v281 = vshll.u32 %v30, 16
  %v283 = vrot.slane %v281, 5
  %v284 = vor.u32 %v280, %v283
  %v285 = vrot.slane %v284, 4
  %v287 = vshll.u32 %v31, 16
  %v289 = vrot.slane %v287, 5
  %v290 = vsel %vm52, %v285, %v289
  %v292 = vshrl.u32 %v48, 16
  %v294 = vrot.slane %v292, 4
  %v295 = vshll.u32 %v48, 16
  %v297 = vrot.slane %v295, 5
  %v298 = vor.u32 %v294, %v297
  %v299 = vrot.slane %v298, 4
  %v301 = vshll.u32 %v49, 16
  %v303 = vrot.slane %v301, 5
  %v304 = vsel %vm52, %v299, %v303
  %v321 = vunpack.c.l.b16 %v14
  %v322 = vunpack.c.l.b16 %v16
  %v323 = vunpack.c.l.b16 %v18
  %v324 = vunpack.c.l.b16 %v20
  %v325 = vunpack.c.l.b16 %v22
  %v326 = vunpack.c.l.b16 %v24
  %v327 = vunpack.c.l.b16 %v26
  %v328 = vunpack.c.l.b16 %v28
  %v329 = vunpack.c.l.b16 %v32
  %v330 = vunpack.c.l.b16 %v34
  %v331 = vunpack.c.l.b16 %v36
  %v332 = vunpack.c.l.b16 %v38
  %v333 = vunpack.c.l.b16 %v40
  %v334 = vunpack.c.l.b16 %v42
  %v335 = vunpack.c.l.b16 %v44
  %v336 = vunpack.c.l.b16 %v46
  %v337 = vpack.c.b16 %v322, %v321
  %v338 = vpack.c.b16 %v324, %v323
  %v339 = vpack.c.b16 %v326, %v325
  %v340 = vpack.c.b16 %v328, %v327
  %v341 = vpack.c.b16 %v330, %v329
  %v342 = vpack.c.b16 %v332, %v331
  %v343 = vpack.c.b16 %v334, %v333
  %v344 = vpack.c.b16 %v336, %v335
  %v345 = vunpack.c.l.b16 %v66
  %v346 = vunpack.c.l.b16 %v80
  %v347 = vunpack.c.l.b16 %v94
  %v348 = vunpack.c.l.b16 %v108
  %v349 = vunpack.c.l.b16 %v122
  %v350 = vunpack.c.l.b16 %v136
  %v351 = vunpack.c.l.b16 %v150
  %v352 = vunpack.c.l.b16 %v164
  %v353 = vunpack.c.l.b16 %v178
  %v354 = vunpack.c.l.b16 %v192
  %v355 = vunpack.c.l.b16 %v206
  %v356 = vunpack.c.l.b16 %v220
  %v357 = vunpack.c.l.b16 %v234
  %v358 = vunpack.c.l.b16 %v248
  %v359 = vunpack.c.l.b16 %v262
  %v360 = vunpack.c.l.b16 %v276
  %v361 = vpack.c.b16 %v346, %v345
  %v362 = vpack.c.b16 %v348, %v347
  %v363 = vpack.c.b16 %v350, %v349
  %v364 = vpack.c.b16 %v352, %v351
  %v365 = vpack.c.b16 %v354, %v353
  %v366 = vpack.c.b16 %v356, %v355
  %v367 = vpack.c.b16 %v358, %v357
  %v368 = vpack.c.b16 %v360, %v359
  %369 = vrot.lane.b32.xlu0 %v361, 64
  %v370 = vpop.permute.xlu0 %369
  %371 = vrot.lane.b32.xlu0 %v362, 64
  %v372 = vpop.permute.xlu0 %371
  %373 = vrot.lane.b32.xlu0 %v363, 64
  %v374 = vpop.permute.xlu0 %373
  %375 = vrot.lane.b32.xlu0 %v364, 64
  %v376 = vpop.permute.xlu0 %375
  %377 = vrot.lane.b32.xlu0 %v365, 64
  %v378 = vpop.permute.xlu0 %377
  %379 = vrot.lane.b32.xlu0 %v366, 64
  %v380 = vpop.permute.xlu0 %379
  %381 = vrot.lane.b32.xlu0 %v367, 64
  %v382 = vpop.permute.xlu0 %381
  %383 = vrot.lane.b32.xlu0 %v368, 64
  %v384 = vpop.permute.xlu0 %383
  %v387 = vunpack.c.l.b16 %v30
  %v388 = vunpack.c.l.b16 %v48
  %v389 = vpack.c.b16 %v323, %v322
  %v390 = vpack.c.b16 %v325, %v324
  %v391 = vpack.c.b16 %v327, %v326
  %v392 = vpack.c.b16 %v387, %v328
  %v393 = vpack.c.b16 %v331, %v330
  %v394 = vpack.c.b16 %v333, %v332
  %v395 = vpack.c.b16 %v335, %v334
  %v396 = vpack.c.b16 %v388, %v336
  %v397 = vunpack.c.l.b16 %v290
  %v398 = vunpack.c.l.b16 %v304
  %v399 = vpack.c.b16 %v347, %v346
  %v400 = vpack.c.b16 %v349, %v348
  %v401 = vpack.c.b16 %v351, %v350
  %v402 = vpack.c.b16 %v397, %v352
  %v403 = vpack.c.b16 %v355, %v354
  %v404 = vpack.c.b16 %v357, %v356
  %v405 = vpack.c.b16 %v359, %v358
  %v406 = vpack.c.b16 %v398, %v360
  %407 = vrot.lane.b32.xlu0 %v399, 64
  %v408 = vpop.permute.xlu0 %407
  %409 = vrot.lane.b32.xlu0 %v400, 64
  %v410 = vpop.permute.xlu0 %409
  %411 = vrot.lane.b32.xlu0 %v401, 64
  %v412 = vpop.permute.xlu0 %411
  %413 = vrot.lane.b32.xlu0 %v402, 64
  %v414 = vpop.permute.xlu0 %413
  %415 = vrot.lane.b32.xlu0 %v403, 64
  %v416 = vpop.permute.xlu0 %415
  %417 = vrot.lane.b32.xlu0 %v404, 64
  %v418 = vpop.permute.xlu0 %417
  %419 = vrot.lane.b32.xlu0 %v405, 64
  %v420 = vpop.permute.xlu0 %419
  %421 = vrot.lane.b32.xlu0 %v406, 64
  %v422 = vpop.permute.xlu0 %421
  %vm423 = vcmask 523264
  %v426 = vsel %vm423, %v337, %v370
  %v430 = vsel %vm423, %v338, %v372
  %v434 = vsel %vm423, %v339, %v374
  %v438 = vsel %vm423, %v340, %v376
  %v442 = vsel %vm423, %v341, %v378
  %v446 = vsel %vm423, %v342, %v380
  %v450 = vsel %vm423, %v343, %v382
  %v454 = vsel %vm423, %v344, %v384
  %v458 = vsel %vm423, %v389, %v408
  %v462 = vsel %vm423, %v390, %v410
  %v466 = vsel %vm423, %v391, %v412
  %v470 = vsel %vm423, %v392, %v414
  %v474 = vsel %vm423, %v393, %v416
  %v478 = vsel %vm423, %v394, %v418
  %v482 = vsel %vm423, %v395, %v420
  %v486 = vsel %vm423, %v396, %v422
  %v488 = vld [vmem:[%s1] sm:$0xf]
  %v489 = vld [vmem:[%s1 + $0x4] sm:$0xf]
  %v490 = vld [vmem:[%s1 + $0x8] sm:$0xf]
  %v491 = vld [vmem:[%s1 + $0xc] sm:$0xf]
  %v492 = vld [vmem:[%s1 + $0x10] sm:$0xf]
  %v493 = vld [vmem:[%s1 + $0x14] sm:$0xf]
  %v494 = vld [vmem:[%s1 + $0x18] sm:$0xf]
  %v495 = vld [vmem:[%s1 + $0x1c] sm:$0xf]
  %v496 = vld [vmem:[%s1 + $0x20] sm:$0xf]
  %v497 = vld [vmem:[%s1 + $0x24] sm:$0xf]
  %v498 = vld [vmem:[%s1 + $0x28] sm:$0xf]
  %v499 = vld [vmem:[%s1 + $0x2c] sm:$0xf]
  %v500 = vld [vmem:[%s1 + $0x30] sm:$0xf]
  %v501 = vld [vmem:[%s1 + $0x34] sm:$0xf]
  %v502 = vld [vmem:[%s1 + $0x38] sm:$0xf]
  %v503 = vld [vmem:[%s1 + $0x3c] sm:$0xf]
  %v504 = vld [vmem:[%s1 + $0x40] sm:$0xf]
  %v505 = vld [vmem:[%s1 + $0x44] sm:$0xf]
  %v506 = vld [vmem:[%s1 + $0x48] sm:$0xf]
  %v507 = vld [vmem:[%s1 + $0x4c] sm:$0xf]
  %v508 = vld [vmem:[%s1 + $0x50] sm:$0xf]
  %v509 = vld [vmem:[%s1 + $0x54] sm:$0xf]
  %v510 = vld [vmem:[%s1 + $0x58] sm:$0xf]
  %v511 = vld [vmem:[%s1 + $0x5c] sm:$0xf]
  %v512 = vld [vmem:[%s1 + $0x60] sm:$0xf]
  %v513 = vld [vmem:[%s1 + $0x64] sm:$0xf]
  %v514 = vld [vmem:[%s1 + $0x68] sm:$0xf]
  %v515 = vld [vmem:[%s1 + $0x6c] sm:$0xf]
  %v516 = vld [vmem:[%s1 + $0x70] sm:$0xf]
  %v517 = vld [vmem:[%s1 + $0x74] sm:$0xf]
  %v518 = vld [vmem:[%s1 + $0x78] sm:$0xf]
  %v519 = vld [vmem:[%s1 + $0x7c] sm:$0xf]
  %v520 = vld [vmem:[%s2] sm:$0x1]
  %v522 = vperm.slane %v520, 0
  %v556 = vunpack.c.l.b16 %v488
  %v557 = vunpack.c.l.b16 %v489
  %v558 = vunpack.c.l.b16 %v490
  %v559 = vunpack.c.l.b16 %v491
  %v560 = vunpack.c.l.b16 %v492
  %v561 = vunpack.c.l.b16 %v493
  %v562 = vunpack.c.l.b16 %v494
  %v563 = vunpack.c.l.b16 %v495
  %v564 = vunpack.c.l.b16 %v496
  %v565 = vunpack.c.l.b16 %v497
  %v566 = vunpack.c.l.b16 %v498
  %v567 = vunpack.c.l.b16 %v499
  %v568 = vunpack.c.l.b16 %v500
  %v569 = vunpack.c.l.b16 %v501
  %v570 = vunpack.c.l.b16 %v502
  %v571 = vunpack.c.l.b16 %v503
  %v572 = vunpack.c.l.b16 %v504
  %v573 = vunpack.c.l.b16 %v505
  %v574 = vunpack.c.l.b16 %v506
  %v575 = vunpack.c.l.b16 %v507
  %v576 = vunpack.c.l.b16 %v508
  %v577 = vunpack.c.l.b16 %v509
  %v578 = vunpack.c.l.b16 %v510
  %v579 = vunpack.c.l.b16 %v511
  %v580 = vunpack.c.l.b16 %v512
  %v581 = vunpack.c.l.b16 %v513
  %v582 = vunpack.c.l.b16 %v514
  %v583 = vunpack.c.l.b16 %v515
  %v584 = vunpack.c.l.b16 %v516
  %v585 = vunpack.c.l.b16 %v517
  %v586 = vunpack.c.l.b16 %v518
  %v587 = vunpack.c.l.b16 %v519
  %v588 = vpack.c.b16 %v557, %v556
  %v589 = vpack.c.b16 %v559, %v558
  %v590 = vpack.c.b16 %v561, %v560
  %v591 = vpack.c.b16 %v563, %v562
  %v592 = vpack.c.b16 %v565, %v564
  %v593 = vpack.c.b16 %v567, %v566
  %v594 = vpack.c.b16 %v569, %v568
  %v595 = vpack.c.b16 %v571, %v570
  %v596 = vpack.c.b16 %v573, %v572
  %v597 = vpack.c.b16 %v575, %v574
  %v598 = vpack.c.b16 %v577, %v576
  %v599 = vpack.c.b16 %v579, %v578
  %v600 = vpack.c.b16 %v581, %v580
  %v601 = vpack.c.b16 %v583, %v582
  %v602 = vpack.c.b16 %v585, %v584
  %v603 = vpack.c.b16 %v587, %v586
  %620 = vmatpush.bf16.msra.mxu0 %v595
  %621 = vmatpush.bf16.msra.mxu0 %v594
  %622 = vmatpush.bf16.msra.mxu0 %v593
  %623 = vmatpush.bf16.msra.mxu0 %v592
  %624 = vmatpush.bf16.msra.mxu0 %v591
  %625 = vmatpush.bf16.msra.mxu0 %v590
  %626 = vmatpush.bf16.msra.mxu0 %v589
  %627 = vmatpush.bf16.msra.mxu0 %v588
  %628 = vmatmul.bf16.gmra.mxu0 %v426
  %v629 = vpop.f32.mrf.mxu0
  %v630 = vadd.f32 %v522, %v629
  %v631 = vpop.f32.mrf.mxu0
  %v632 = vadd.f32 %v522, %v631
  %633 = vmatmul.bf16.gmra.mxu0 %v430
  %v634 = vpop.f32.mrf.mxu0
  %v635 = vadd.f32 %v522, %v634
  %v636 = vpop.f32.mrf.mxu0
  %v637 = vadd.f32 %v522, %v636
  %638 = vmatmul.bf16.gmra.mxu0 %v434
  %v639 = vpop.f32.mrf.mxu0
  %v640 = vadd.f32 %v522, %v639
  %v641 = vpop.f32.mrf.mxu0
  %v642 = vadd.f32 %v522, %v641
  %643 = vmatmul.bf16.gmra.mxu0 %v438
  %v644 = vpop.f32.mrf.mxu0
  %v645 = vadd.f32 %v522, %v644
  %v646 = vpop.f32.mrf.mxu0
  %v647 = vadd.f32 %v522, %v646
  %648 = vmatmul.bf16.gmra.mxu0 %v442
  %v649 = vpop.f32.mrf.mxu0
  %v650 = vadd.f32 %v522, %v649
  %v651 = vpop.f32.mrf.mxu0
  %v652 = vadd.f32 %v522, %v651
  %653 = vmatmul.bf16.gmra.mxu0 %v446
  %v654 = vpop.f32.mrf.mxu0
  %v655 = vadd.f32 %v522, %v654
  %v656 = vpop.f32.mrf.mxu0
  %v657 = vadd.f32 %v522, %v656
  %658 = vmatmul.bf16.gmra.mxu0 %v450
  %v659 = vpop.f32.mrf.mxu0
  %v660 = vadd.f32 %v522, %v659
  %v661 = vpop.f32.mrf.mxu0
  %v662 = vadd.f32 %v522, %v661
  %663 = vmatmul.bf16.gmra.mxu0 %v454
  %v664 = vpop.f32.mrf.mxu0
  %v665 = vadd.f32 %v522, %v664
  %v666 = vpop.f32.mrf.mxu0
  %v667 = vadd.f32 %v522, %v666
  %668 = vdwg.mxu0
  %669 = vmatpush.bf16.msra.mxu0 %v603
  %670 = vmatpush.bf16.msra.mxu0 %v602
  %671 = vmatpush.bf16.msra.mxu0 %v601
  %672 = vmatpush.bf16.msra.mxu0 %v600
  %673 = vmatpush.bf16.msra.mxu0 %v599
  %674 = vmatpush.bf16.msra.mxu0 %v598
  %675 = vmatpush.bf16.msra.mxu0 %v597
  %676 = vmatpush.bf16.msra.mxu0 %v596
  %677 = vmatmul.bf16.gmra.mxu0 %v458
  %v678 = vpop.f32.mrf.mxu0
  %v679 = vadd.f32 %v630, %v678
  %v680 = vpop.f32.mrf.mxu0
  %v681 = vadd.f32 %v632, %v680
  %682 = vmatmul.bf16.gmra.mxu0 %v462
  %v683 = vpop.f32.mrf.mxu0
  %v684 = vadd.f32 %v635, %v683
  %v685 = vpop.f32.mrf.mxu0
  %v686 = vadd.f32 %v637, %v685
  %687 = vmatmul.bf16.gmra.mxu0 %v466
  %v688 = vpop.f32.mrf.mxu0
  %v689 = vadd.f32 %v640, %v688
  %v690 = vpop.f32.mrf.mxu0
  %v691 = vadd.f32 %v642, %v690
  %692 = vmatmul.bf16.gmra.mxu0 %v470
  %v693 = vpop.f32.mrf.mxu0
  %v694 = vadd.f32 %v645, %v693
  %v695 = vpop.f32.mrf.mxu0
  %v696 = vadd.f32 %v647, %v695
  %697 = vmatmul.bf16.gmra.mxu0 %v474
  %v698 = vpop.f32.mrf.mxu0
  %v699 = vadd.f32 %v650, %v698
  %v700 = vpop.f32.mrf.mxu0
  %v701 = vadd.f32 %v652, %v700
  %702 = vmatmul.bf16.gmra.mxu0 %v478
  %v703 = vpop.f32.mrf.mxu0
  %v704 = vadd.f32 %v655, %v703
  %v705 = vpop.f32.mrf.mxu0
  %v706 = vadd.f32 %v657, %v705
  %707 = vmatmul.bf16.gmra.mxu0 %v482
  %v708 = vpop.f32.mrf.mxu0
  %v709 = vadd.f32 %v660, %v708
  %v710 = vpop.f32.mrf.mxu0
  %v711 = vadd.f32 %v662, %v710
  %712 = vmatmul.bf16.gmra.mxu0 %v486
  %v713 = vpop.f32.mrf.mxu0
  %v714 = vadd.f32 %v665, %v713
  %v715 = vpop.f32.mrf.mxu0
  %v716 = vadd.f32 %v667, %v715
  %717 = vdwg.mxu0
  %v718 = vmax.f32 %v679, 0.0
  %v719 = vmax.f32 %v681, 0.0
  %v720 = vmax.f32 %v684, 0.0
  %v721 = vmax.f32 %v686, 0.0
  %v722 = vmax.f32 %v689, 0.0
  %v723 = vmax.f32 %v691, 0.0
  %v724 = vmax.f32 %v694, 0.0
  %v725 = vmax.f32 %v696, 0.0
  %v726 = vmax.f32 %v699, 0.0
  %v727 = vmax.f32 %v701, 0.0
  %v728 = vmax.f32 %v704, 0.0
  %v729 = vmax.f32 %v706, 0.0
  %v730 = vmax.f32 %v709, 0.0
  %v731 = vmax.f32 %v711, 0.0
  %v732 = vmax.f32 %v714, 0.0
  %v733 = vmax.f32 %v716, 0.0
  %v734 = vpack.c.bf16 %v718, %v718
  %v735 = vpack.c.bf16 %v719, %v719
  %v736 = vpack.c.bf16 %v720, %v720
  %v737 = vpack.c.bf16 %v721, %v721
  %v738 = vpack.c.bf16 %v722, %v722
  %v739 = vpack.c.bf16 %v723, %v723
  %v740 = vpack.c.bf16 %v724, %v724
  %v741 = vpack.c.bf16 %v725, %v725
  %v742 = vpack.c.bf16 %v726, %v726
  %v743 = vpack.c.bf16 %v727, %v727
  %v744 = vpack.c.bf16 %v728, %v728
  %v745 = vpack.c.bf16 %v729, %v729
  %v746 = vpack.c.bf16 %v730, %v730
  %v747 = vpack.c.bf16 %v731, %v731
  %v748 = vpack.c.bf16 %v732, %v732
  %v749 = vpack.c.bf16 %v733, %v733
  %vm750 = vcmask 257024
  %751 = vst.msk [vmem:[%s3] sm:$0xf] %vm750, %v734
  %752 = vst.msk [vmem:[%s3 + $0x4] sm:$0xf] %vm750, %v735
  %753 = vst.msk [vmem:[%s3 + $0x8] sm:$0xf] %vm750, %v736
  %754 = vst.msk [vmem:[%s3 + $0xc] sm:$0xf] %vm750, %v737
  %755 = vst.msk [vmem:[%s3 + $0x10] sm:$0xf] %vm750, %v738
  %756 = vst.msk [vmem:[%s3 + $0x14] sm:$0xf] %vm750, %v739
  %757 = vst.msk [vmem:[%s3 + $0x18] sm:$0xf] %vm750, %v740
  %758 = vst.msk [vmem:[%s3 + $0x1c] sm:$0xf] %vm750, %v741
  %759 = vst.msk [vmem:[%s3 + $0x20] sm:$0xf] %vm750, %v742
  %760 = vst.msk [vmem:[%s3 + $0x24] sm:$0xf] %vm750, %v743
  %761 = vst.msk [vmem:[%s3 + $0x28] sm:$0xf] %vm750, %v744
  %762 = vst.msk [vmem:[%s3 + $0x2c] sm:$0xf] %vm750, %v745
  %763 = vst.msk [vmem:[%s3 + $0x30] sm:$0xf] %vm750, %v746
  %764 = vst.msk [vmem:[%s3 + $0x34] sm:$0xf] %vm750, %v747
  %765 = vst.msk [vmem:[%s3 + $0x38] sm:$0xf] %vm750, %v748
  %766 = vst.msk [vmem:[%s3 + $0x3c] sm:$0xf] %vm750, %v749
  // Predicated region
  $region14: #{dqn_forward.4} parent=0 // pred_check
    _
  $region15: #{dqn_forward.4} parent=0 // pred_check_branch
    %768 = sbr.rel (0) target = $region17
  $region16: #{dqn_forward.4} parent=0 // pred_region
    _
  $region17: #{dqn_forward.4} parent=0 // pred_fallthru
    _
  // Predicated region
  $region18: #{dqn_forward.4} parent=0 // pred_check
    _
  $region19: #{dqn_forward.4} parent=0 // pred_check_branch
    %770 = sbr.rel (0) target = $region21
  $region20: #{dqn_forward.4} parent=0 // pred_region
    _
  $region21: #{dqn_forward.4} parent=0 // pred_fallthru
    _

// kernel: dqn_forward.5
$region0: #{dqn_forward.5}
  #allocation0 [shape = 'u32[]', space=smem, size = 0x4, offset = 0x4, fixed_abs, tag = 'smem constant byte address 0x4 - core index']
  #allocation1 [shape = 'u32[72,128]{1,0:T(1,128)}', space=vmem, size = 0x9000, scoped, tag = 'internal scratch']
  %s0 = inlined_call_operand.vmem [shape: bf16[2,4,4,128], index: 0, kind: input, shape index: {}]
  %s1 = inlined_call_operand.vmem [shape: bf16[512,64], index: 1, kind: input, shape index: {}]
  %s2 = inlined_call_operand.vmem [shape: f32[1,64], index: 2, kind: input, shape index: {}]
  %s3 = inlined_call_operand.vmem [shape: bf16[2,9,64], index: 3, kind: output, shape index: {}]
  %s4 = sld [smem:[#allocation0]]
  $region22: #{dqn_forward.5} parent=0
    _
  %s6 = ssub.s32 1, %s4
  %s7 = scalar_select 0, %s6, %s4
  // Predicated region
  $region2: #{dqn_forward.5} parent=0 // pred_check
    _
  $region3: #{dqn_forward.5} parent=0 // pred_check_branch
    %9 = sbr.rel (0) target = $region5
  $region4: #{dqn_forward.5} parent=0 // pred_region
    _
  $region5: #{dqn_forward.5} parent=0 // pred_fallthru
    _
  // Predicated region
  $region6: #{dqn_forward.5} parent=0 // pred_check
    _
  $region7: #{dqn_forward.5} parent=0 // pred_check_branch
    %11 = sbr.rel (0) target = $region9
  $region8: #{dqn_forward.5} parent=0 // pred_region
    _
  $region9: #{dqn_forward.5} parent=0 // pred_fallthru
    _
  // Predicated region
  $region10: #{dqn_forward.5} parent=0 // pred_check
    _
  $region11: #{dqn_forward.5} parent=0 // pred_check_branch
    %13 = sbr.rel (0) target = $region13
  $region12: #{dqn_forward.5} parent=0 // pred_region
    _
  $region13: #{dqn_forward.5} parent=0 // pred_fallthru
    _
  %v14 = vld [vmem:[%s0] sm:$0x3]
  %v15 = vld [vmem:[%s0 + $0x2] sm:$0x3]
  %v16 = vld [vmem:[%s0 + $0x4] sm:$0x3]
  %v17 = vld [vmem:[%s0 + $0x6] sm:$0x3]
  %v18 = vld [vmem:[%s0 + $0x8] sm:$0x3]
  %v19 = vld [vmem:[%s0 + $0xa] sm:$0x3]
  %v20 = vld [vmem:[%s0 + $0xc] sm:$0x3]
  %v21 = vld [vmem:[%s0 + $0xe] sm:$0x3]
  %v28 = vrot.slane %v14, 1
  %v29 = vrot.slane %v14, 2
  %v30 = vrot.slane %v14, 3
  %v31 = vrot.slane %v15, 1
  %v32 = vrot.slane %v15, 2
  %v33 = vrot.slane %v15, 3
  %v34 = vrot.slane %v16, 1
  %v35 = vrot.slane %v16, 2
  %v36 = vrot.slane %v16, 3
  %v37 = vrot.slane %v18, 1
  %v38 = vrot.slane %v18, 2
  %v39 = vrot.slane %v18, 3
  %v40 = vrot.slane %v19, 1
  %v41 = vrot.slane %v19, 2
  %v42 = vrot.slane %v19, 3
  %v43 = vrot.slane %v20, 1
  %v44 = vrot.slane %v20, 2
  %v45 = vrot.slane %v20, 3
  %vm46 = vcmask 1040384
  %v49 = vsel %vm46, %v14, %v28
  %vm50 = vcmask 1042434
  %v53 = vsel %vm50, %v29, %v30
  %vm54 = vcmask 1041408
  %v55 = vsel %vm54, %v49, %v53
  %vm57 = vcmask 1041409
  %v58 = vsel %vm57, %v14, %v28
  %vm59 = vcmask 1043459
  %v60 = vsel %vm59, %v29, %v30
  %vm61 = vcmask 1042433
  %v62 = vsel %vm61, %v58, %v60
  %v64 = vrot.slane %v62, 1
  %v67 = vsel %vm46, %v15, %v31
  %v70 = vsel %vm50, %v32, %v33
  %v71 = vsel %vm54, %v67, %v70
  %v73 = vsel %vm57, %v15, %v31
  %v74 = vsel %vm59, %v32, %v33
  %v75 = vsel %vm61, %v73, %v74
  %v77 = vrot.slane %v75, 1
  %v80 = vsel %vm46, %v16, %v34
  %v83 = vsel %vm50, %v35, %v36
  %v84 = vsel %vm54, %v80, %v83
  %v86 = vsel %vm57, %v16, %v34
  %v87 = vsel %vm59, %v35, %v36
  %v88 = vsel %vm61, %v86, %v87
  %v90 = vrot.slane %v88, 1
  %v93 = vsel %vm46, %v18, %v37
  %v96 = vsel %vm50, %v38, %v39
  %v97 = vsel %vm54, %v93, %v96
  %v99 = vsel %vm57, %v18, %v37
  %v100 = vsel %vm59, %v38, %v39
  %v101 = vsel %vm61, %v99, %v100
  %v103 = vrot.slane %v101, 1
  %v106 = vsel %vm46, %v19, %v40
  %v109 = vsel %vm50, %v41, %v42
  %v110 = vsel %vm54, %v106, %v109
  %v112 = vsel %vm57, %v19, %v40
  %v113 = vsel %vm59, %v41, %v42
  %v114 = vsel %vm61, %v112, %v113
  %v116 = vrot.slane %v114, 1
  %v119 = vsel %vm46, %v20, %v43
  %v122 = vsel %vm50, %v44, %v45
  %v123 = vsel %vm54, %v119, %v122
  %v125 = vsel %vm57, %v20, %v43
  %v126 = vsel %vm59, %v44, %v45
  %v127 = vsel %vm61, %v125, %v126
  %v129 = vrot.slane %v127, 1
  %v130 = vunpack.i.l.s16 %v55
  %v131 = vunpack.i.h.s16 %v55
  %v132 = vunpack.i.l.s16 %v64
  %v133 = vunpack.i.l.s16 %v71
  %v134 = vunpack.i.h.s16 %v71
  %v135 = vunpack.i.l.s16 %v77
  %v136 = vunpack.i.l.s16 %v84
  %v137 = vunpack.i.h.s16 %v84
  %v138 = vunpack.i.l.s16 %v90
  %v139 = vunpack.i.l.s16 %v97
  %v140 = vunpack.i.h.s16 %v97
  %v141 = vunpack.i.l.s16 %v103
  %v142 = vunpack.i.l.s16 %v110
  %v143 = vunpack.i.h.s16 %v110
  %v144 = vunpack.i.l.s16 %v116
  %v145 = vunpack.i.l.s16 %v123
  %v146 = vunpack.i.h.s16 %v123
  %v147 = vunpack.i.l.s16 %v129
  %v148 = vunpack.i.h.s16 %v64
  %v149 = vunpack.i.h.s16 %v77
  %v150 = vunpack.i.h.s16 %v90
  %v151 = vunpack.i.h.s16 %v103
  %v152 = vunpack.i.h.s16 %v116
  %v153 = vunpack.i.h.s16 %v129
  %v156 = vrot.slane %v17, 1
  %v157 = vrot.slane %v17, 2
  %v158 = vrot.slane %v17, 3
  %v159 = vrot.slane %v21, 1
  %v160 = vrot.slane %v21, 2
  %v161 = vrot.slane %v21, 3
  %v164 = vsel %vm46, %v17, %v156
  %v167 = vsel %vm50, %v157, %v158
  %v168 = vsel %vm54, %v164, %v167
  %v170 = vsel %vm57, %v17, %v156
  %v171 = vsel %vm59, %v157, %v158
  %v172 = vsel %vm61, %v170, %v171
  %v174 = vrot.slane %v172, 1
  %v177 = vsel %vm46, %v21, %v159
  %v180 = vsel %vm50, %v160, %v161
  %v181 = vsel %vm54, %v177, %v180
  %v183 = vsel %vm57, %v21, %v159
  %v184 = vsel %vm59, %v160, %v161
  %v185 = vsel %vm61, %v183, %v184
  %v187 = vrot.slane %v185, 1
  %v188 = vunpack.i.l.s16 %v168
  %v189 = vunpack.i.h.s16 %v168
  %v190 = vunpack.i.l.s16 %v174
  %v191 = vunpack.i.l.s16 %v181
  %v192 = vunpack.i.h.s16 %v181
  %v193 = vunpack.i.l.s16 %v187
  %v194 = vunpack.i.h.s16 %v174
  %v195 = vunpack.i.h.s16 %v187
  %v196 = vpack.i.b16 %v131, %v130
  %v197 = vpack.i.b16 %v133, %v132
  %v198 = vpack.i.b16 %v135, %v134
  %v199 = vpack.i.b16 %v137, %v136
  %v200 = vpack.i.b16 %v139, %v138
  %v201 = vpack.i.b16 %v141, %v140
  %v202 = vpack.i.b16 %v143, %v142
  %v203 = vpack.i.b16 %v145, %v144
  %v204 = vpack.i.b16 %v147, %v146
  %206 = vst [vmem:[#allocation1] ss:$9 sm:$0xff] %v196
  %s208 = scalar_lea.vmem [#allocation1], 1
  %209 = vst [vmem:[%s208] ss:$9 sm:$0xff] %v197
  %s211 = scalar_lea.vmem [#allocation1], 2
  %212 = vst [vmem:[%s211] ss:$9 sm:$0xff] %v198
  %s214 = scalar_lea.vmem [#allocation1], 3
  %215 = vst [vmem:[%s214] ss:$9 sm:$0xff] %v199
  %s217 = scalar_lea.vmem [#allocation1], 4
  %218 = vst [vmem:[%s217] ss:$9 sm:$0xff] %v200
  %s220 = scalar_lea.vmem [#allocation1], 5
  %221 = vst [vmem:[%s220] ss:$9 sm:$0xff] %v201
  %s223 = scalar_lea.vmem [#allocation1], 6
  %224 = vst [vmem:[%s223] ss:$9 sm:$0xff] %v202
  %s226 = scalar_lea.vmem [#allocation1], 7
  %227 = vst [vmem:[%s226] ss:$9 sm:$0xff] %v203
  %v228 = vld [vmem:[#allocation1] sm:$0xff]
  %230 = vst [vmem:[#allocation1] ss:$9 sm:$0xff] %v204
  %v231 = vld [vmem:[#allocation1] sm:$0xff]
  %v234 = vpack.i.b16 %v132, %v131
  %v235 = vpack.i.b16 %v134, %v148
  %v236 = vpack.i.b16 %v149, %v135
  %v237 = vpack.i.b16 %v138, %v137
  %v238 = vpack.i.b16 %v140, %v150
  %v239 = vpack.i.b16 %v151, %v141
  %v240 = vpack.i.b16 %v144, %v143
  %v241 = vpack.i.b16 %v146, %v152
  %v242 = vpack.i.b16 %v153, %v147
  %244 = vst [vmem:[#allocation1] ss:$9 sm:$0xff] %v234
  %s246 = scalar_lea.vmem [#allocation1], 1
  %247 = vst [vmem:[%s246] ss:$9 sm:$0xff] %v235
  %s249 = scalar_lea.vmem [#allocation1], 2
  %250 = vst [vmem:[%s249] ss:$9 sm:$0xff] %v236
  %s252 = scalar_lea.vmem [#allocation1], 3
  %253 = vst [vmem:[%s252] ss:$9 sm:$0xff] %v237
  %s255 = scalar_lea.vmem [#allocation1], 4
  %256 = vst [vmem:[%s255] ss:$9 sm:$0xff] %v238
  %s258 = scalar_lea.vmem [#allocation1], 5
  %259 = vst [vmem:[%s258] ss:$9 sm:$0xff] %v239
  %s261 = scalar_lea.vmem [#allocation1], 6
  %262 = vst [vmem:[%s261] ss:$9 sm:$0xff] %v240
  %s264 = scalar_lea.vmem [#allocation1], 7
  %265 = vst [vmem:[%s264] ss:$9 sm:$0xff] %v241
  %v266 = vld [vmem:[#allocation1] sm:$0xff]
  %268 = vst [vmem:[#allocation1] ss:$9 sm:$0xff] %v242
  %v269 = vld [vmem:[#allocation1] sm:$0xff]
  %v272 = vpack.i.b16 %v134, %v133
  %v273 = vpack.i.b16 %v136, %v135
  %v274 = vpack.i.b16 %v189, %v188
  %v275 = vpack.i.b16 %v142, %v190
  %v276 = vpack.i.b16 %v146, %v145
  %v277 = vpack.i.b16 %v191, %v147
  %v278 = vpack.i.b16 %v193, %v192
  %280 = vst [vmem:[#allocation1] ss:$9 sm:$0xff] %v272
  %s282 = scalar_lea.vmem [#allocation1], 1
  %283 = vst [vmem:[%s282] ss:$9 sm:$0xff] %v273
  %s284 = scalar_lea.vmem [#allocation1], 2
  %285 = vst [vmem:[%s284] ss:$9 sm:$0xff] %v237
  %s287 = scalar_lea.vmem [#allocation1], 3
  %288 = vst [vmem:[%s287] ss:$9 sm:$0xff] %v274
  %s290 = scalar_lea.vmem [#allocation1], 4
  %291 = vst [vmem:[%s290] ss:$9 sm:$0xff] %v275
  %s292 = scalar_lea.vmem [#allocation1], 5
  %293 = vst [vmem:[%s292] ss:$9 sm:$0xff] %v240
  %s295 = scalar_lea.vmem [#allocation1], 6
  %296 = vst [vmem:[%s295] ss:$9 sm:$0xff] %v276
  %s298 = scalar_lea.vmem [#allocation1], 7
  %299 = vst [vmem:[%s298] ss:$9 sm:$0xff] %v277
  %v300 = vld [vmem:[#allocation1] sm:$0xff]
  %302 = vst [vmem:[#allocation1] ss:$9 sm:$0xff] %v278
  %v303 = vld [vmem:[#allocation1] sm:$0xff]
  %v306 = vpack.i.b16 %v137, %v149
  %v307 = vpack.i.b16 %v150, %v138
  %v308 = vpack.i.b16 %v190, %v189
  %v309 = vpack.i.b16 %v143, %v194
  %v310 = vpack.i.b16 %v152, %v144
  %v311 = vpack.i.b16 %v192, %v153
  %v312 = vpack.i.b16 %v195, %v193
  %313 = vst [vmem:[#allocation1] ss:$9 sm:$0xff] %v198
  %s315 = scalar_lea.vmem [#allocation1], 1
  %316 = vst [vmem:[%s315] ss:$9 sm:$0xff] %v306
  %s318 = scalar_lea.vmem [#allocation1], 2
  %319 = vst [vmem:[%s318] ss:$9 sm:$0xff] %v307
  %s321 = scalar_lea.vmem [#allocation1], 3
  %322 = vst [vmem:[%s321] ss:$9 sm:$0xff] %v308
  %s324 = scalar_lea.vmem [#allocation1], 4
  %325 = vst [vmem:[%s324] ss:$9 sm:$0xff] %v309
  %s327 = scalar_lea.vmem [#allocation1], 5
  %328 = vst [vmem:[%s327] ss:$9 sm:$0xff] %v310
  %s329 = scalar_lea.vmem [#allocation1], 6
  %330 = vst [vmem:[%s329] ss:$9 sm:$0xff] %v204
  %s332 = scalar_lea.vmem [#allocation1], 7
  %333 = vst [vmem:[%s332] ss:$9 sm:$0xff] %v311
  %v334 = vld [vmem:[#allocation1] sm:$0xff]
  %336 = vst [vmem:[#allocation1] ss:$9 sm:$0xff] %v312
  %v337 = vld [vmem:[#allocation1] sm:$0xff]
  %v340 = vld [vmem:[%s1] sm:$0xf]
  %v341 = vld [vmem:[%s1 + $0x4] sm:$0xf]
  %v342 = vld [vmem:[%s1 + $0x8] sm:$0xf]
  %v343 = vld [vmem:[%s1 + $0xc] sm:$0xf]
  %v344 = vld [vmem:[%s1 + $0x10] sm:$0xf]
  %v345 = vld [vmem:[%s1 + $0x14] sm:$0xf]
  %v346 = vld [vmem:[%s1 + $0x18] sm:$0xf]
  %v347 = vld [vmem:[%s1 + $0x1c] sm:$0xf]
  %v348 = vld [vmem:[%s1 + $0x20] sm:$0xf]
  %v349 = vld [vmem:[%s1 + $0x24] sm:$0xf]
  %v350 = vld [vmem:[%s1 + $0x28] sm:$0xf]
  %v351 = vld [vmem:[%s1 + $0x2c] sm:$0xf]
  %v352 = vld [vmem:[%s1 + $0x30] sm:$0xf]
  %v353 = vld [vmem:[%s1 + $0x34] sm:$0xf]
  %v354 = vld [vmem:[%s1 + $0x38] sm:$0xf]
  %v355 = vld [vmem:[%s1 + $0x3c] sm:$0xf]
  %v356 = vld [vmem:[%s1 + $0x40] sm:$0xf]
  %v357 = vld [vmem:[%s1 + $0x44] sm:$0xf]
  %v358 = vld [vmem:[%s1 + $0x48] sm:$0xf]
  %v359 = vld [vmem:[%s1 + $0x4c] sm:$0xf]
  %v360 = vld [vmem:[%s1 + $0x50] sm:$0xf]
  %v361 = vld [vmem:[%s1 + $0x54] sm:$0xf]
  %v362 = vld [vmem:[%s1 + $0x58] sm:$0xf]
  %v363 = vld [vmem:[%s1 + $0x5c] sm:$0xf]
  %v364 = vld [vmem:[%s1 + $0x60] sm:$0xf]
  %v365 = vld [vmem:[%s1 + $0x64] sm:$0xf]
  %v366 = vld [vmem:[%s1 + $0x68] sm:$0xf]
  %v367 = vld [vmem:[%s1 + $0x6c] sm:$0xf]
  %v368 = vld [vmem:[%s1 + $0x70] sm:$0xf]
  %v369 = vld [vmem:[%s1 + $0x74] sm:$0xf]
  %v370 = vld [vmem:[%s1 + $0x78] sm:$0xf]
  %v371 = vld [vmem:[%s1 + $0x7c] sm:$0xf]
  %v372 = vld [vmem:[%s1 + $0x80] sm:$0xf]
  %v373 = vld [vmem:[%s1 + $0x84] sm:$0xf]
  %v374 = vld [vmem:[%s1 + $0x88] sm:$0xf]
  %v375 = vld [vmem:[%s1 + $0x8c] sm:$0xf]
  %v376 = vld [vmem:[%s1 + $0x90] sm:$0xf]
  %v377 = vld [vmem:[%s1 + $0x94] sm:$0xf]
  %v378 = vld [vmem:[%s1 + $0x98] sm:$0xf]
  %v379 = vld [vmem:[%s1 + $0x9c] sm:$0xf]
  %v380 = vld [vmem:[%s1 + $0xa0] sm:$0xf]
  %v381 = vld [vmem:[%s1 + $0xa4] sm:$0xf]
  %v382 = vld [vmem:[%s1 + $0xa8] sm:$0xf]
  %v383 = vld [vmem:[%s1 + $0xac] sm:$0xf]
  %v384 = vld [vmem:[%s1 + $0xb0] sm:$0xf]
  %v385 = vld [vmem:[%s1 + $0xb4] sm:$0xf]
  %v386 = vld [vmem:[%s1 + $0xb8] sm:$0xf]
  %v387 = vld [vmem:[%s1 + $0xbc] sm:$0xf]
  %v388 = vld [vmem:[%s1 + $0xc0] sm:$0xf]
  %v389 = vld [vmem:[%s1 + $0xc4] sm:$0xf]
  %v390 = vld [vmem:[%s1 + $0xc8] sm:$0xf]
  %v391 = vld [vmem:[%s1 + $0xcc] sm:$0xf]
  %v392 = vld [vmem:[%s1 + $0xd0] sm:$0xf]
  %v393 = vld [vmem:[%s1 + $0xd4] sm:$0xf]
  %v394 = vld [vmem:[%s1 + $0xd8] sm:$0xf]
  %v395 = vld [vmem:[%s1 + $0xdc] sm:$0xf]
  %v396 = vld [vmem:[%s1 + $0xe0] sm:$0xf]
  %v397 = vld [vmem:[%s1 + $0xe4] sm:$0xf]
  %v398 = vld [vmem:[%s1 + $0xe8] sm:$0xf]
  %v399 = vld [vmem:[%s1 + $0xec] sm:$0xf]
  %v400 = vld [vmem:[%s1 + $0xf0] sm:$0xf]
  %v401 = vld [vmem:[%s1 + $0xf4] sm:$0xf]
  %v402 = vld [vmem:[%s1 + $0xf8] sm:$0xf]
  %v403 = vld [vmem:[%s1 + $0xfc] sm:$0xf]
  %v404 = vld [vmem:[%s2] sm:$0x1]
  %v406 = vperm.slane %v404, 0
  %v472 = vunpack.c.l.b16 %v340
  %v473 = vunpack.c.l.b16 %v341
  %v474 = vunpack.c.l.b16 %v342
  %v475 = vunpack.c.l.b16 %v343
  %v476 = vunpack.c.l.b16 %v344
  %v477 = vunpack.c.l.b16 %v345
  %v478 = vunpack.c.l.b16 %v346
  %v479 = vunpack.c.l.b16 %v347
  %v480 = vunpack.c.l.b16 %v348
  %v481 = vunpack.c.l.b16 %v349
  %v482 = vunpack.c.l.b16 %v350
  %v483 = vunpack.c.l.b16 %v351
  %v484 = vunpack.c.l.b16 %v352
  %v485 = vunpack.c.l.b16 %v353
  %v486 = vunpack.c.l.b16 %v354
  %v487 = vunpack.c.l.b16 %v355
  %v488 = vunpack.c.l.b16 %v356
  %v489 = vunpack.c.l.b16 %v357
  %v490 = vunpack.c.l.b16 %v358
  %v491 = vunpack.c.l.b16 %v359
  %v492 = vunpack.c.l.b16 %v360
  %v493 = vunpack.c.l.b16 %v361
  %v494 = vunpack.c.l.b16 %v362
  %v495 = vunpack.c.l.b16 %v363
  %v496 = vunpack.c.l.b16 %v364
  %v497 = vunpack.c.l.b16 %v365
  %v498 = vunpack.c.l.b16 %v366
  %v499 = vunpack.c.l.b16 %v367
  %v500 = vunpack.c.l.b16 %v368
  %v501 = vunpack.c.l.b16 %v369
  %v502 = vunpack.c.l.b16 %v370
  %v503 = vunpack.c.l.b16 %v371
  %v504 = vunpack.c.l.b16 %v372
  %v505 = vunpack.c.l.b16 %v373
  %v506 = vunpack.c.l.b16 %v374
  %v507 = vunpack.c.l.b16 %v375
  %v508 = vunpack.c.l.b16 %v376
  %v509 = vunpack.c.l.b16 %v377
  %v510 = vunpack.c.l.b16 %v378
  %v511 = vunpack.c.l.b16 %v379
  %v512 = vunpack.c.l.b16 %v380
  %v513 = vunpack.c.l.b16 %v381
  %v514 = vunpack.c.l.b16 %v382
  %v515 = vunpack.c.l.b16 %v383
  %v516 = vunpack.c.l.b16 %v384
  %v517 = vunpack.c.l.b16 %v385
  %v518 = vunpack.c.l.b16 %v386
  %v519 = vunpack.c.l.b16 %v387
  %v520 = vunpack.c.l.b16 %v388
  %v521 = vunpack.c.l.b16 %v389
  %v522 = vunpack.c.l.b16 %v390
  %v523 = vunpack.c.l.b16 %v391
  %v524 = vunpack.c.l.b16 %v392
  %v525 = vunpack.c.l.b16 %v393
  %v526 = vunpack.c.l.b16 %v394
  %v527 = vunpack.c.l.b16 %v395
  %v528 = vunpack.c.l.b16 %v396
  %v529 = vunpack.c.l.b16 %v397
  %v530 = vunpack.c.l.b16 %v398
  %v531 = vunpack.c.l.b16 %v399
  %v532 = vunpack.c.l.b16 %v400
  %v533 = vunpack.c.l.b16 %v401
  %v534 = vunpack.c.l.b16 %v402
  %v535 = vunpack.c.l.b16 %v403
  %v536 = vpack.c.b16 %v473, %v472
  %v537 = vpack.c.b16 %v475, %v474
  %v538 = vpack.c.b16 %v477, %v476
  %v539 = vpack.c.b16 %v479, %v478
  %v540 = vpack.c.b16 %v481, %v480
  %v541 = vpack.c.b16 %v483, %v482
  %v542 = vpack.c.b16 %v485, %v484
  %v543 = vpack.c.b16 %v487, %v486
  %v544 = vpack.c.b16 %v489, %v488
  %v545 = vpack.c.b16 %v491, %v490
  %v546 = vpack.c.b16 %v493, %v492
  %v547 = vpack.c.b16 %v495, %v494
  %v548 = vpack.c.b16 %v497, %v496
  %v549 = vpack.c.b16 %v499, %v498
  %v550 = vpack.c.b16 %v501, %v500
  %v551 = vpack.c.b16 %v503, %v502
  %v552 = vpack.c.b16 %v505, %v504
  %v553 = vpack.c.b16 %v507, %v506
  %v554 = vpack.c.b16 %v509, %v508
  %v555 = vpack.c.b16 %v511, %v510
  %v556 = vpack.c.b16 %v513, %v512
  %v557 = vpack.c.b16 %v515, %v514
  %v558 = vpack.c.b16 %v517, %v516
  %v559 = vpack.c.b16 %v519, %v518
  %v560 = vpack.c.b16 %v521, %v520
  %v561 = vpack.c.b16 %v523, %v522
  %v562 = vpack.c.b16 %v525, %v524
  %v563 = vpack.c.b16 %v527, %v526
  %v564 = vpack.c.b16 %v529, %v528
  %v565 = vpack.c.b16 %v531, %v530
  %v566 = vpack.c.b16 %v533, %v532
  %v567 = vpack.c.b16 %v535, %v534
  %600 = vmatpush.bf16.msra.mxu0 %v543
  %601 = vmatpush.bf16.msra.mxu0 %v542
  %602 = vmatpush.bf16.msra.mxu0 %v541
  %603 = vmatpush.bf16.msra.mxu0 %v540
  %604 = vmatpush.bf16.msra.mxu0 %v539
  %605 = vmatpush.bf16.msra.mxu0 %v538
  %606 = vmatpush.bf16.msra.mxu0 %v537
  %607 = vmatpush.bf16.msra.mxu0 %v536
  %608 = vmatmul.bf16.gmra.mxu0 %v228
  %v609 = vpop.f32.mrf.mxu0
  %v610 = vadd.f32 %v406, %v609
  %v611 = vpop.f32.mrf.mxu0
  %v612 = vadd.f32 %v406, %v611
  %613 = vmatmul.bf16.gmra.mxu0 %v231
  %v614 = vpop.f32.mrf.mxu0
  %v615 = vadd.f32 %v406, %v614
  %v616 = vpop.f32.mrf.mxu0
  %617 = vdwg.mxu0
  %618 = vmatpush.bf16.msra.mxu0 %v551
  %619 = vmatpush.bf16.msra.mxu0 %v550
  %620 = vmatpush.bf16.msra.mxu0 %v549
  %621 = vmatpush.bf16.msra.mxu0 %v548
  %622 = vmatpush.bf16.msra.mxu0 %v547
  %623 = vmatpush.bf16.msra.mxu0 %v546
  %624 = vmatpush.bf16.msra.mxu0 %v545
  %625 = vmatpush.bf16.msra.mxu0 %v544
  %626 = vmatmul.bf16.gmra.mxu0 %v266
  %v627 = vpop.f32.mrf.mxu0
  %v628 = vadd.f32 %v610, %v627
  %v629 = vpop.f32.mrf.mxu0
  %v630 = vadd.f32 %v612, %v629
  %631 = vmatmul.bf16.gmra.mxu0 %v269
  %v632 = vpop.f32.mrf.mxu0
  %v633 = vadd.f32 %v615, %v632
  %v634 = vpop.f32.mrf.mxu0
  %635 = vdwg.mxu0
  %636 = vmatpush.bf16.msra.mxu0 %v559
  %637 = vmatpush.bf16.msra.mxu0 %v558
  %638 = vmatpush.bf16.msra.mxu0 %v557
  %639 = vmatpush.bf16.msra.mxu0 %v556
  %640 = vmatpush.bf16.msra.mxu0 %v555
  %641 = vmatpush.bf16.msra.mxu0 %v554
  %642 = vmatpush.bf16.msra.mxu0 %v553
  %643 = vmatpush.bf16.msra.mxu0 %v552
  %644 = vmatmul.bf16.gmra.mxu0 %v300
  %v645 = vpop.f32.mrf.mxu0
  %v646 = vadd.f32 %v628, %v645
  %v647 = vpop.f32.mrf.mxu0
  %v648 = vadd.f32 %v630, %v647
  %649 = vmatmul.bf16.gmra.mxu0 %v303
  %v650 = vpop.f32.mrf.mxu0
  %v651 = vadd.f32 %v633, %v650
  %v652 = vpop.f32.mrf.mxu0
  %653 = vdwg.mxu0
  %654 = vmatpush.bf16.msra.mxu0 %v567
  %655 = vmatpush.bf16.msra.mxu0 %v566
  %656 = vmatpush.bf16.msra.mxu0 %v565
  %657 = vmatpush.bf16.msra.mxu0 %v564
  %658 = vmatpush.bf16.msra.mxu0 %v563
  %659 = vmatpush.bf16.msra.mxu0 %v562
  %660 = vmatpush.bf16.msra.mxu0 %v561
  %661 = vmatpush.bf16.msra.mxu0 %v560
  %662 = vmatmul.bf16.gmra.mxu0 %v334
  %v663 = vpop.f32.mrf.mxu0
  %v664 = vadd.f32 %v646, %v663
  %v665 = vpop.f32.mrf.mxu0
  %v666 = vadd.f32 %v648, %v665
  %667 = vmatmul.bf16.gmra.mxu0 %v337
  %v668 = vpop.f32.mrf.mxu0
  %v669 = vadd.f32 %v651, %v668
  %v670 = vpop.f32.mrf.mxu0
  %671 = vdwg.mxu0
  %v672 = vmax.f32 %v664, 0.0
  %v673 = vmax.f32 %v666, 0.0
  %v674 = vmax.f32 %v669, 0.0
  %v678 = vrot.slane %v672, 1
  %v679 = vrot.slane %v672, 2
  %v680 = vrot.slane %v672, 3
  %v681 = vrot.slane %v672, 4
  %v682 = vrot.slane %v672, 5
  %v683 = vrot.slane %v672, 6
  %v684 = vrot.slane %v672, 7
  %v685 = vrot.slane %v673, 1
  %v686 = vrot.slane %v673, 2
  %v687 = vrot.slane %v673, 3
  %v688 = vrot.slane %v673, 4
  %v689 = vrot.slane %v673, 5
  %v690 = vrot.slane %v673, 6
  %v691 = vrot.slane %v673, 7
  %v692 = vrot.slane %v674, 1
  %693 = vst [vmem:[#allocation1] ss:$9 sm:$0xff] %v672
  %s694 = scalar_lea.vmem [#allocation1], 1
  %695 = vst [vmem:[%s694] ss:$9 sm:$0xff] %v678
  %s696 = scalar_lea.vmem [#allocation1], 2
  %697 = vst [vmem:[%s696] ss:$9 sm:$0xff] %v679
  %s698 = scalar_lea.vmem [#allocation1], 3
  %699 = vst [vmem:[%s698] ss:$9 sm:$0xff] %v680
  %s700 = scalar_lea.vmem [#allocation1], 4
  %701 = vst [vmem:[%s700] ss:$9 sm:$0xff] %v681
  %s702 = scalar_lea.vmem [#allocation1], 5
  %703 = vst [vmem:[%s702] ss:$9 sm:$0xff] %v682
  %s704 = scalar_lea.vmem [#allocation1], 6
  %705 = vst [vmem:[%s704] ss:$9 sm:$0xff] %v683
  %s706 = scalar_lea.vmem [#allocation1], 7
  %707 = vst [vmem:[%s706] ss:$9 sm:$0xff] %v684
  %v708 = vld [vmem:[#allocation1] sm:$0xff]
  %709 = vst [vmem:[#allocation1] ss:$9 sm:$0xff] %v673
  %v710 = vld [vmem:[#allocation1] sm:$0xff]
  %711 = vst [vmem:[#allocation1] ss:$9 sm:$0xff] %v685
  %712 = vst [vmem:[%s694] ss:$9 sm:$0xff] %v686
  %713 = vst [vmem:[%s696] ss:$9 sm:$0xff] %v687
  %714 = vst [vmem:[%s698] ss:$9 sm:$0xff] %v688
  %715 = vst [vmem:[%s700] ss:$9 sm:$0xff] %v689
  %716 = vst [vmem:[%s702] ss:$9 sm:$0xff] %v690
  %717 = vst [vmem:[%s704] ss:$9 sm:$0xff] %v691
  %718 = vst [vmem:[%s706] ss:$9 sm:$0xff] %v674
  %v719 = vld [vmem:[#allocation1] sm:$0xff]
  %720 = vst [vmem:[#allocation1] ss:$9 sm:$0xff] %v692
  %v721 = vld [vmem:[#allocation1] sm:$0xff]
  %v726 = vpack.c.bf16 %v708, %v708
  %v727 = vpack.c.bf16 %v710, %v710
  %v728 = vpack.c.bf16 %v719, %v719
  %v729 = vpack.c.bf16 %v721, %v721
  %vm730 = vcmask 519168
  %731 = vst.msk [vmem:[%s3] sm:$0xf] %vm730, %v726
  %vm732 = vcmask 516096
  %vm733 = vsmask.f32 256
  %vm734 = vmand %vm732, %vm733
  %v735 = vld [vmem:[%s3 + $0x4] sm:$0x1]
  %v736 = vsel %vm734, %v727, %v735
  %737 = vst [vmem:[%s3 + $0x4] sm:$0x1] %v736
  %738 = vst.msk [vmem:[%s3 + $0x8] sm:$0xf] %vm730, %v728
  %v739 = vld [vmem:[%s3 + $0xc] sm:$0x1]
  %v740 = vsel %vm734, %v729, %v739
  %741 = vst [vmem:[%s3 + $0xc] sm:$0x1] %v740
  // Predicated region
  $region14: #{dqn_forward.5} parent=0 // pred_check
    _
  $region15: #{dqn_forward.5} parent=0 // pred_check_branch
    %743 = sbr.rel (0) target = $region17
  $region16: #{dqn_forward.5} parent=0 // pred_region
    _
  $region17: #{dqn_forward.5} parent=0 // pred_fallthru
    _
  // Predicated region
  $region18: #{dqn_forward.5} parent=0 // pred_check
    _
  $region19: #{dqn_forward.5} parent=0 // pred_check_branch
    %745 = sbr.rel (0) target = $region21
  $region20: #{dqn_forward.5} parent=0 // pred_region
    _
  $region21: #{dqn_forward.5} parent=0 // pred_fallthru
    _

// kernel: dqn_forward.7
$region0: #{dqn_forward.7}
  #allocation0 [shape = 'u32[]', space=smem, size = 0x4, offset = 0x4, fixed_abs, tag = 'smem constant byte address 0x4 - core index']
  #allocation1 [shape = 'u32[72,128]{1,0:T(1,128)}', space=vmem, size = 0x9000, scoped, tag = 'internal scratch']
  %s0 = inlined_call_operand.vmem [shape: bf16[2,64], index: 0, kind: input, shape index: {}]
  %s1 = inlined_call_operand.vmem [shape: bf16[64,512], index: 1, kind: input, shape index: {}]
  %s2 = inlined_call_operand.vmem [shape: f32[1,512], index: 2, kind: input, shape index: {}]
  %s3 = inlined_call_operand.vmem [shape: bf16[512,128], index: 3, kind: input, shape index: {}]
  %s4 = inlined_call_operand.vmem [shape: f32[1,128], index: 4, kind: input, shape index: {}]
  %s5 = inlined_call_operand.hbm [shape: f32[2,128], index: 5, kind: output, shape index: {}]
  %s6 = sld [smem:[#allocation0]]
  $region30: #{dqn_forward.7} parent=0
    _
  %s8 = ssub.s32 1, %s6
  %s9 = scalar_select 0, %s8, %s6
  $region1: #{dqn_forward.7} parent=0
    #allocation2 [shape = 'u8[1024]{0}', space=vmem, size = 0x400, scoped, tag = 'output window, operand 0, single buffered']
    #allocation3 [shape = 's32[1]{0}', space=sflag, size = 0x4, scoped, tag = 'scoped memory for dqn_forward.7']
    %10 = vsyncpa [#allocation3], 0
    // Predicated region
    $region2: #{dqn_forward.7} parent=1 // pred_check
      _
    $region3: #{dqn_forward.7} parent=1 // pred_check_branch
      %12 = sbr.rel (0) target = $region5
    $region4: #{dqn_forward.7} parent=1 // pred_region
      _
    $region5: #{dqn_forward.7} parent=1 // pred_fallthru
      _
    // Predicated region
    $region6: #{dqn_forward.7} parent=1 // pred_check
      _
    $region7: #{dqn_forward.7} parent=1 // pred_check_branch
      %14 = sbr.rel (0) target = $region9
    $region8: #{dqn_forward.7} parent=1 // pred_region
      _
    $region9: #{dqn_forward.7} parent=1 // pred_fallthru
      _
    // Predicated region
    $region10: #{dqn_forward.7} parent=1 // pred_check
      _
    $region11: #{dqn_forward.7} parent=1 // pred_check_branch
      %16 = sbr.rel (0) target = $region13
    $region12: #{dqn_forward.7} parent=1 // pred_region
      _
    $region13: #{dqn_forward.7} parent=1 // pred_fallthru
      _
    // Predicated region
    $region14: #{dqn_forward.7} parent=1 // pred_check
      _
    $region15: #{dqn_forward.7} parent=1 // pred_check_branch
      %18 = sbr.rel (0) target = $region17
    $region16: #{dqn_forward.7} parent=1 // pred_region
      _
    $region17: #{dqn_forward.7} parent=1 // pred_fallthru
      _
    // Predicated region
    $region18: #{dqn_forward.7} parent=1 // pred_check
      _
    $region19: #{dqn_forward.7} parent=1 // pred_check_branch
      %20 = sbr.rel (0) target = $region21
    $region20: #{dqn_forward.7} parent=1 // pred_region
      _
    $region21: #{dqn_forward.7} parent=1 // pred_fallthru
      _
    %v22 = vld [vmem:[%s0] sm:$0x1]
    %v23 = vld [vmem:[%s1] sm:$0xff]
    %v24 = vld [vmem:[%s1 + $0x8] sm:$0xff]
    %v25 = vld [vmem:[%s1 + $0x10] sm:$0xff]
    %v26 = vld [vmem:[%s1 + $0x18] sm:$0xff]
    %v27 = vld [vmem:[%s1 + $0x20] sm:$0xff]
    %v28 = vld [vmem:[%s1 + $0x28] sm:$0xff]
    %v29 = vld [vmem:[%s1 + $0x30] sm:$0xff]
    %v30 = vld [vmem:[%s1 + $0x38] sm:$0xff]
    %v31 = vld [vmem:[%s1 + $0x40] sm:$0xff]
    %v32 = vld [vmem:[%s1 + $0x48] sm:$0xff]
    %v33 = vld [vmem:[%s1 + $0x50] sm:$0xff]
    %v34 = vld [vmem:[%s1 + $0x58] sm:$0xff]
    %v35 = vld [vmem:[%s1 + $0x60] sm:$0xff]
    %v36 = vld [vmem:[%s1 + $0x68] sm:$0xff]
    %v37 = vld [vmem:[%s1 + $0x70] sm:$0xff]
    %v38 = vld [vmem:[%s1 + $0x78] sm:$0xff]
    %v39 = vld [vmem:[%s2] sm:$0xf]
    %v41 = vperm.slane %v39, 0
    %v42 = vperm.slane %v39, 1
    %v43 = vperm.slane %v39, 2
    %v44 = vperm.slane %v39, 3
    %v65 = vunpack.c.l.b16 %v23
    %v66 = vunpack.c.h.b16 %v23
    %v67 = vunpack.c.l.b16 %v24
    %v68 = vunpack.c.h.b16 %v24
    %v69 = vunpack.c.l.b16 %v25
    %v70 = vunpack.c.h.b16 %v25
    %v71 = vunpack.c.l.b16 %v26
    %v72 = vunpack.c.h.b16 %v26
    %v73 = vunpack.c.l.b16 %v27
    %v74 = vunpack.c.h.b16 %v27
    %v75 = vunpack.c.l.b16 %v28
    %v76 = vunpack.c.h.b16 %v28
    %v77 = vunpack.c.l.b16 %v29
    %v78 = vunpack.c.h.b16 %v29
    %v79 = vunpack.c.l.b16 %v30
    %v80 = vunpack.c.h.b16 %v30
    %v81 = vunpack.c.l.b16 %v31
    %v82 = vunpack.c.h.b16 %v31
    %v83 = vunpack.c.l.b16 %v32
    %v84 = vunpack.c.h.b16 %v32
    %v85 = vunpack.c.l.b16 %v33
    %v86 = vunpack.c.h.b16 %v33
    %v87 = vunpack.c.l.b16 %v34
    %v88 = vunpack.c.h.b16 %v34
    %v89 = vunpack.c.l.b16 %v35
    %v90 = vunpack.c.h.b16 %v35
    %v91 = vunpack.c.l.b16 %v36
    %v92 = vunpack.c.h.b16 %v36
    %v93 = vunpack.c.l.b16 %v37
    %v94 = vunpack.c.h.b16 %v37
    %v95 = vunpack.c.l.b16 %v38
    %v96 = vunpack.c.h.b16 %v38
    %v97 = vpack.c.b16 %v69, %v65
    %v98 = vpack.c.b16 %v70, %v66
    %v99 = vpack.c.b16 %v71, %v67
    %v100 = vpack.c.b16 %v72, %v68
    %v101 = vpack.c.b16 %v77, %v73
    %v102 = vpack.c.b16 %v78, %v74
    %v103 = vpack.c.b16 %v79, %v75
    %v104 = vpack.c.b16 %v80, %v76
    %v105 = vpack.c.b16 %v85, %v81
    %v106 = vpack.c.b16 %v86, %v82
    %v107 = vpack.c.b16 %v87, %v83
    %v108 = vpack.c.b16 %v88, %v84
    %v109 = vpack.c.b16 %v93, %v89
    %v110 = vpack.c.b16 %v94, %v90
    %v111 = vpack.c.b16 %v95, %v91
    %v112 = vpack.c.b16 %v96, %v92
    %vm129 = vcmask 523264
    %v131 = vsel %vm129, %v22, 0
    %133 = vmatpush.bf16.msra.mxu0 0
    %134 = vmatpush.bf16.msra.mxu0 0
    %135 = vmatpush.bf16.msra.mxu0 0
    %136 = vmatpush.bf16.msra.mxu0 0
    %137 = vmatpush.bf16.msra.mxu0 %v109
    %138 = vmatpush.bf16.msra.mxu0 %v105
    %139 = vmatpush.bf16.msra.mxu0 %v101
    %140 = vmatpush.bf16.msra.mxu0 %v97
    %141 = vmatmul.bf16.gmra.mxu0 %v131
    %v142 = vpop.f32.mrf.mxu0
    %v143 = vadd.f32 %v41, %v142
    %v144 = vpop.f32.mrf.mxu0
    %145 = vdwg.mxu0
    %146 = vmatpush.bf16.msra.mxu0 0
    %147 = vmatpush.bf16.msra.mxu0 0
    %148 = vmatpush.bf16.msra.mxu0 0
    %149 = vmatpush.bf16.msra.mxu0 0
    %150 = vmatpush.bf16.msra.mxu0 %v110
    %151 = vmatpush.bf16.msra.mxu0 %v106
    %152 = vmatpush.bf16.msra.mxu0 %v102
    %153 = vmatpush.bf16.msra.mxu0 %v98
    %154 = vmatmul.bf16.gmra.mxu0 %v131
    %v155 = vpop.f32.mrf.mxu0
    %v156 = vadd.f32 %v42, %v155
    %v157 = vpop.f32.mrf.mxu0
    %158 = vdwg.mxu0
    %159 = vmatpush.bf16.msra.mxu0 0
    %160 = vmatpush.bf16.msra.mxu0 0
    %161 = vmatpush.bf16.msra.mxu0 0
    %162 = vmatpush.bf16.msra.mxu0 0
    %163 = vmatpush.bf16.msra.mxu0 %v111
    %164 = vmatpush.bf16.msra.mxu0 %v107
    %165 = vmatpush.bf16.msra.mxu0 %v103
    %166 = vmatpush.bf16.msra.mxu0 %v99
    %167 = vmatmul.bf16.gmra.mxu0 %v131
    %v168 = vpop.f32.mrf.mxu0
    %v169 = vadd.f32 %v43, %v168
    %v170 = vpop.f32.mrf.mxu0
    %171 = vdwg.mxu0
    %172 = vmatpush.bf16.msra.mxu0 0
    %173 = vmatpush.bf16.msra.mxu0 0
    %174 = vmatpush.bf16.msra.mxu0 0
    %175 = vmatpush.bf16.msra.mxu0 0
    %176 = vmatpush.bf16.msra.mxu0 %v112
    %177 = vmatpush.bf16.msra.mxu0 %v108
    %178 = vmatpush.bf16.msra.mxu0 %v104
    %179 = vmatpush.bf16.msra.mxu0 %v100
    %180 = vmatmul.bf16.gmra.mxu0 %v131
    %v181 = vpop.f32.mrf.mxu0
    %v182 = vadd.f32 %v44, %v181
    %v183 = vpop.f32.mrf.mxu0
    %184 = vdwg.mxu0
    %v185 = vmax.f32 %v143, 0.0
    %v186 = vmax.f32 %v156, 0.0
    %v187 = vmax.f32 %v169, 0.0
    %v188 = vmax.f32 %v182, 0.0
    %v189 = vpack.c.bf16 %v185, %v185
    %v190 = vpack.c.bf16 %v186, %v186
    %v191 = vpack.c.bf16 %v187, %v187
    %v192 = vpack.c.bf16 %v188, %v188
    %v193 = vld [vmem:[%s3] sm:$0xf]
    %v194 = vld [vmem:[%s3 + $0x4] sm:$0xf]
    %v195 = vld [vmem:[%s3 + $0x8] sm:$0xf]
    %v196 = vld [vmem:[%s3 + $0xc] sm:$0xf]
    %v197 = vld [vmem:[%s3 + $0x10] sm:$0xf]
    %v198 = vld [vmem:[%s3 + $0x14] sm:$0xf]
    %v199 = vld [vmem:[%s3 + $0x18] sm:$0xf]
    %v200 = vld [vmem:[%s3 + $0x1c] sm:$0xf]
    %v201 = vld [vmem:[%s3 + $0x20] sm:$0xf]
    %v202 = vld [vmem:[%s3 + $0x24] sm:$0xf]
    %v203 = vld [vmem:[%s3 + $0x28] sm:$0xf]
    %v204 = vld [vmem:[%s3 + $0x2c] sm:$0xf]
    %v205 = vld [vmem:[%s3 + $0x30] sm:$0xf]
    %v206 = vld [vmem:[%s3 + $0x34] sm:$0xf]
    %v207 = vld [vmem:[%s3 + $0x38] sm:$0xf]
    %v208 = vld [vmem:[%s3 + $0x3c] sm:$0xf]
    %v209 = vld [vmem:[%s3 + $0x40] sm:$0xf]
    %v210 = vld [vmem:[%s3 + $0x44] sm:$0xf]
    %v211 = vld [vmem:[%s3 + $0x48] sm:$0xf]
    %v212 = vld [vmem:[%s3 + $0x4c] sm:$0xf]
    %v213 = vld [vmem:[%s3 + $0x50] sm:$0xf]
    %v214 = vld [vmem:[%s3 + $0x54] sm:$0xf]
    %v215 = vld [vmem:[%s3 + $0x58] sm:$0xf]
    %v216 = vld [vmem:[%s3 + $0x5c] sm:$0xf]
    %v217 = vld [vmem:[%s3 + $0x60] sm:$0xf]
    %v218 = vld [vmem:[%s3 + $0x64] sm:$0xf]
    %v219 = vld [vmem:[%s3 + $0x68] sm:$0xf]
    %v220 = vld [vmem:[%s3 + $0x6c] sm:$0xf]
    %v221 = vld [vmem:[%s3 + $0x70] sm:$0xf]
    %v222 = vld [vmem:[%s3 + $0x74] sm:$0xf]
    %v223 = vld [vmem:[%s3 + $0x78] sm:$0xf]
    %v224 = vld [vmem:[%s3 + $0x7c] sm:$0xf]
    %v225 = vld [vmem:[%s3 + $0x80] sm:$0xf]
    %v226 = vld [vmem:[%s3 + $0x84] sm:$0xf]
    %v227 = vld [vmem:[%s3 + $0x88] sm:$0xf]
    %v228 = vld [vmem:[%s3 + $0x8c] sm:$0xf]
    %v229 = vld [vmem:[%s3 + $0x90] sm:$0xf]
    %v230 = vld [vmem:[%s3 + $0x94] sm:$0xf]
    %v231 = vld [vmem:[%s3 + $0x98] sm:$0xf]
    %v232 = vld [vmem:[%s3 + $0x9c] sm:$0xf]
    %v233 = vld [vmem:[%s3 + $0xa0] sm:$0xf]
    %v234 = vld [vmem:[%s3 + $0xa4] sm:$0xf]
    %v235 = vld [vmem:[%s3 + $0xa8] sm:$0xf]
    %v236 = vld [vmem:[%s3 + $0xac] sm:$0xf]
    %v237 = vld [vmem:[%s3 + $0xb0] sm:$0xf]
    %v238 = vld [vmem:[%s3 + $0xb4] sm:$0xf]
    %v239 = vld [vmem:[%s3 + $0xb8] sm:$0xf]
    %v240 = vld [vmem:[%s3 + $0xbc] sm:$0xf]
    %v241 = vld [vmem:[%s3 + $0xc0] sm:$0xf]
    %v242 = vld [vmem:[%s3 + $0xc4] sm:$0xf]
    %v243 = vld [vmem:[%s3 + $0xc8] sm:$0xf]
    %v244 = vld [vmem:[%s3 + $0xcc] sm:$0xf]
    %v245 = vld [vmem:[%s3 + $0xd0] sm:$0xf]
    %v246 = vld [vmem:[%s3 + $0xd4] sm:$0xf]
    %v247 = vld [vmem:[%s3 + $0xd8] sm:$0xf]
    %v248 = vld [vmem:[%s3 + $0xdc] sm:$0xf]
    %v249 = vld [vmem:[%s3 + $0xe0] sm:$0xf]
    %v250 = vld [vmem:[%s3 + $0xe4] sm:$0xf]
    %v251 = vld [vmem:[%s3 + $0xe8] sm:$0xf]
    %v252 = vld [vmem:[%s3 + $0xec] sm:$0xf]
    %v253 = vld [vmem:[%s3 + $0xf0] sm:$0xf]
    %v254 = vld [vmem:[%s3 + $0xf4] sm:$0xf]
    %v255 = vld [vmem:[%s3 + $0xf8] sm:$0xf]
    %v256 = vld [vmem:[%s3 + $0xfc] sm:$0xf]
    %v257 = vld [vmem:[%s4] sm:$0x1]
    %v259 = vperm.slane %v257, 0
    %v325 = vunpack.c.l.b16 %v193
    %v326 = vunpack.c.l.b16 %v194
    %v327 = vunpack.c.l.b16 %v195
    %v328 = vunpack.c.l.b16 %v196
    %v329 = vunpack.c.l.b16 %v197
    %v330 = vunpack.c.l.b16 %v198
    %v331 = vunpack.c.l.b16 %v199
    %v332 = vunpack.c.l.b16 %v200
    %v333 = vunpack.c.l.b16 %v201
    %v334 = vunpack.c.l.b16 %v202
    %v335 = vunpack.c.l.b16 %v203
    %v336 = vunpack.c.l.b16 %v204
    %v337 = vunpack.c.l.b16 %v205
    %v338 = vunpack.c.l.b16 %v206
    %v339 = vunpack.c.l.b16 %v207
    %v340 = vunpack.c.l.b16 %v208
    %v341 = vunpack.c.l.b16 %v209
    %v342 = vunpack.c.l.b16 %v210
    %v343 = vunpack.c.l.b16 %v211
    %v344 = vunpack.c.l.b16 %v212
    %v345 = vunpack.c.l.b16 %v213
    %v346 = vunpack.c.l.b16 %v214
    %v347 = vunpack.c.l.b16 %v215
    %v348 = vunpack.c.l.b16 %v216
    %v349 = vunpack.c.l.b16 %v217
    %v350 = vunpack.c.l.b16 %v218
    %v351 = vunpack.c.l.b16 %v219
    %v352 = vunpack.c.l.b16 %v220
    %v353 = vunpack.c.l.b16 %v221
    %v354 = vunpack.c.l.b16 %v222
    %v355 = vunpack.c.l.b16 %v223
    %v356 = vunpack.c.l.b16 %v224
    %v357 = vunpack.c.l.b16 %v225
    %v358 = vunpack.c.l.b16 %v226
    %v359 = vunpack.c.l.b16 %v227
    %v360 = vunpack.c.l.b16 %v228
    %v361 = vunpack.c.l.b16 %v229
    %v362 = vunpack.c.l.b16 %v230
    %v363 = vunpack.c.l.b16 %v231
    %v364 = vunpack.c.l.b16 %v232
    %v365 = vunpack.c.l.b16 %v233
    %v366 = vunpack.c.l.b16 %v234
    %v367 = vunpack.c.l.b16 %v235
    %v368 = vunpack.c.l.b16 %v236
    %v369 = vunpack.c.l.b16 %v237
    %v370 = vunpack.c.l.b16 %v238
    %v371 = vunpack.c.l.b16 %v239
    %v372 = vunpack.c.l.b16 %v240
    %v373 = vunpack.c.l.b16 %v241
    %v374 = vunpack.c.l.b16 %v242
    %v375 = vunpack.c.l.b16 %v243
    %v376 = vunpack.c.l.b16 %v244
    %v377 = vunpack.c.l.b16 %v245
    %v378 = vunpack.c.l.b16 %v246
    %v379 = vunpack.c.l.b16 %v247
    %v380 = vunpack.c.l.b16 %v248
    %v381 = vunpack.c.l.b16 %v249
    %v382 = vunpack.c.l.b16 %v250
    %v383 = vunpack.c.l.b16 %v251
    %v384 = vunpack.c.l.b16 %v252
    %v385 = vunpack.c.l.b16 %v253
    %v386 = vunpack.c.l.b16 %v254
    %v387 = vunpack.c.l.b16 %v255
    %v388 = vunpack.c.l.b16 %v256
    %v389 = vpack.c.b16 %v326, %v325
    %v390 = vpack.c.b16 %v328, %v327
    %v391 = vpack.c.b16 %v330, %v329
    %v392 = vpack.c.b16 %v332, %v331
    %v393 = vpack.c.b16 %v334, %v333
    %v394 = vpack.c.b16 %v336, %v335
    %v395 = vpack.c.b16 %v338, %v337
    %v396 = vpack.c.b16 %v340, %v339
    %v397 = vpack.c.b16 %v342, %v341
    %v398 = vpack.c.b16 %v344, %v343
    %v399 = vpack.c.b16 %v346, %v345
    %v400 = vpack.c.b16 %v348, %v347
    %v401 = vpack.c.b16 %v350, %v349
    %v402 = vpack.c.b16 %v352, %v351
    %v403 = vpack.c.b16 %v354, %v353
    %v404 = vpack.c.b16 %v356, %v355
    %v405 = vpack.c.b16 %v358, %v357
    %v406 = vpack.c.b16 %v360, %v359
    %v407 = vpack.c.b16 %v362, %v361
    %v408 = vpack.c.b16 %v364, %v363
    %v409 = vpack.c.b16 %v366, %v365
    %v410 = vpack.c.b16 %v368, %v367
    %v411 = vpack.c.b16 %v370, %v369
    %v412 = vpack.c.b16 %v372, %v371
    %v413 = vpack.c.b16 %v374, %v373
    %v414 = vpack.c.b16 %v376, %v375
    %v415 = vpack.c.b16 %v378, %v377
    %v416 = vpack.c.b16 %v380, %v379
    %v417 = vpack.c.b16 %v382, %v381
    %v418 = vpack.c.b16 %v384, %v383
    %v419 = vpack.c.b16 %v386, %v385
    %v420 = vpack.c.b16 %v388, %v387
    %453 = vmatpush.bf16.msra.mxu0 %v396
    %454 = vmatpush.bf16.msra.mxu0 %v395
    %455 = vmatpush.bf16.msra.mxu0 %v394
    %456 = vmatpush.bf16.msra.mxu0 %v393
    %457 = vmatpush.bf16.msra.mxu0 %v392
    %458 = vmatpush.bf16.msra.mxu0 %v391
    %459 = vmatpush.bf16.msra.mxu0 %v390
    %460 = vmatpush.bf16.msra.mxu0 %v389
    %461 = vmatmul.bf16.gmra.mxu0 %v189
    %v462 = vpop.f32.mrf.mxu0
    %v463 = vadd.f32 %v259, %v462
    %v464 = vpop.f32.mrf.mxu0
    %465 = vdwg.mxu0
    %466 = vmatpush.bf16.msra.mxu0 %v404
    %467 = vmatpush.bf16.msra.mxu0 %v403
    %468 = vmatpush.bf16.msra.mxu0 %v402
    %469 = vmatpush.bf16.msra.mxu0 %v401
    %470 = vmatpush.bf16.msra.mxu0 %v400
    %471 = vmatpush.bf16.msra.mxu0 %v399
    %472 = vmatpush.bf16.msra.mxu0 %v398
    %473 = vmatpush.bf16.msra.mxu0 %v397
    %474 = vmatmul.bf16.gmra.mxu0 %v190
    %v475 = vpop.f32.mrf.mxu0
    %v476 = vadd.f32 %v463, %v475
    %v477 = vpop.f32.mrf.mxu0
    %478 = vdwg.mxu0
    %479 = vmatpush.bf16.msra.mxu0 %v412
    %480 = vmatpush.bf16.msra.mxu0 %v411
    %481 = vmatpush.bf16.msra.mxu0 %v410
    %482 = vmatpush.bf16.msra.mxu0 %v409
    %483 = vmatpush.bf16.msra.mxu0 %v408
    %484 = vmatpush.bf16.msra.mxu0 %v407
    %485 = vmatpush.bf16.msra.mxu0 %v406
    %486 = vmatpush.bf16.msra.mxu0 %v405
    %487 = vmatmul.bf16.gmra.mxu0 %v191
    %v488 = vpop.f32.mrf.mxu0
    %v489 = vadd.f32 %v476, %v488
    %v490 = vpop.f32.mrf.mxu0
    %491 = vdwg.mxu0
    %492 = vmatpush.bf16.msra.mxu0 %v420
    %493 = vmatpush.bf16.msra.mxu0 %v419
    %494 = vmatpush.bf16.msra.mxu0 %v418
    %495 = vmatpush.bf16.msra.mxu0 %v417
    %496 = vmatpush.bf16.msra.mxu0 %v416
    %497 = vmatpush.bf16.msra.mxu0 %v415
    %498 = vmatpush.bf16.msra.mxu0 %v414
    %499 = vmatpush.bf16.msra.mxu0 %v413
    %500 = vmatmul.bf16.gmra.mxu0 %v192
    %v501 = vpop.f32.mrf.mxu0
    %v502 = vadd.f32 %v489, %v501
    %v503 = vpop.f32.mrf.mxu0
    %504 = vdwg.mxu0
    %505 = vst [vmem:[#allocation2] sm:$0x3] %v502
    // Predicated region
    $region22: #{dqn_forward.7} parent=1 // pred_check
      _
    $region23: #{dqn_forward.7} parent=1 // pred_check_branch
      %507 = sbr.rel (0) target = $region25
    $region24: #{dqn_forward.7} parent=1 // pred_region
      %509 = vsyncadd [#allocation3], 0
      %s511 = sshll.u32 [#allocation2], 4
      %s512 = int_to_ptr.vmem [resolvable:$true] %s511
      %s513 = sshll.u32 %s5, 4
      %s514 = int_to_ptr.hbm [resolvable:$true] %s513
      %516 = dma.vmem_to_hbm [thread:$0]  %s512, 32, %s514, [#allocation3]
    $region25: #{dqn_forward.7} parent=1 // pred_fallthru
      _
    // Predicated region
    $region26: #{dqn_forward.7} parent=1 // pred_check
      _
    $region27: #{dqn_forward.7} parent=1 // pred_check_branch
      %518 = sbr.rel (0) target = $region29
    $region28: #{dqn_forward.7} parent=1 // pred_region
      %520 = dma.done [#allocation3], 32
    $region29: #{dqn_forward.7} parent=1 // pred_fallthru
      _
    %521 = vsyncpa [#allocation3], 1

// kernel: dqn_forward.6
$region0: #{dqn_forward.6}
  #allocation0 [shape = 'u32[]', space=smem, size = 0x4, offset = 0x4, fixed_abs, tag = 'smem constant byte address 0x4 - core index']
  #allocation1 [shape = 'u32[72,128]{1,0:T(1,128)}', space=vmem, size = 0x9000, scoped, tag = 'internal scratch']
  %s0 = inlined_call_operand.vmem [shape: bf16[2,3,3,64], index: 0, kind: input, shape index: {}]
  %s1 = inlined_call_operand.vmem [shape: bf16[576,64], index: 1, kind: input, shape index: {}]
  %s2 = inlined_call_operand.vmem [shape: f32[1,64], index: 2, kind: input, shape index: {}]
  %s3 = inlined_call_operand.vmem [shape: bf16[2,1,64], index: 3, kind: output, shape index: {}]
  %s4 = sld [smem:[#allocation0]]
  $region22: #{dqn_forward.6} parent=0
    _
  %s6 = ssub.s32 1, %s4
  %s7 = scalar_select 0, %s6, %s4
  // Predicated region
  $region2: #{dqn_forward.6} parent=0 // pred_check
    _
  $region3: #{dqn_forward.6} parent=0 // pred_check_branch
    %9 = sbr.rel (0) target = $region5
  $region4: #{dqn_forward.6} parent=0 // pred_region
    _
  $region5: #{dqn_forward.6} parent=0 // pred_fallthru
    _
  // Predicated region
  $region6: #{dqn_forward.6} parent=0 // pred_check
    _
  $region7: #{dqn_forward.6} parent=0 // pred_check_branch
    %11 = sbr.rel (0) target = $region9
  $region8: #{dqn_forward.6} parent=0 // pred_region
    _
  $region9: #{dqn_forward.6} parent=0 // pred_fallthru
    _
  // Predicated region
  $region10: #{dqn_forward.6} parent=0 // pred_check
    _
  $region11: #{dqn_forward.6} parent=0 // pred_check_branch
    %13 = sbr.rel (0) target = $region13
  $region12: #{dqn_forward.6} parent=0 // pred_region
    _
  $region13: #{dqn_forward.6} parent=0 // pred_fallthru
    _
  %v15 = vld [vmem:[%s0] sm:$0x3]
  %v16 = vld [vmem:[%s0 + $0x2] sm:$0x3]
  %v17 = vld [vmem:[%s0 + $0x4] sm:$0x3]
  %v18 = vld [vmem:[%s0 + $0x6] sm:$0x3]
  %v19 = vld [vmem:[%s0 + $0x8] sm:$0x3]
  %v20 = vld [vmem:[%s0 + $0xa] sm:$0x3]
  %22 = vst [vmem:[#allocation1] ss:$4 sm:$0xff] %v15
  %v23 = vld.sshfl [vmem:[#allocation1] sm:$0xff pattern:$0x73625140]
  %s26 = scalar_lea.vmem [#allocation1], 32
  %27 = vst [vmem:[%s26] ss:$4 sm:$0xff] %v18
  %v28 = vld.sshfl [vmem:[#allocation1 + $0x20] sm:$0xff pattern:$0x73625140]
  %v30 = vunpack.c.l.b16 %v23
  %v31 = vunpack.c.l.b16 %v28
  %v32 = vrot.slane %v31, 7
  %vm33 = vcmask 1041409
  %v34 = vsel %vm33, %v32, %v30
  %v35 = vpack.c.b16 %v34, %v34
  %36 = vst [vmem:[#allocation1] ss:$4 sm:$0xff] %v15
  %v37 = vld.sshfl [vmem:[#allocation1] sm:$0xff pattern:$0x73625140]
  %s39 = scalar_lea.vmem [#allocation1], 32
  %40 = vst [vmem:[%s39] ss:$4 sm:$0xff] %v18
  %v41 = vld.sshfl [vmem:[#allocation1 + $0x20] sm:$0xff pattern:$0x73625140]
  %v43 = vunpack.c.l.b16 %v37
  %v44 = vunpack.c.l.b16 %v41
  %v45 = vrot.slane %v43, 1
  %v46 = vsel %vm33, %v44, %v45
  %v47 = vpack.c.b16 %v46, %v46
  %48 = vrot.lane.b32.xlu0 %v47, 64
  %v49 = vpop.permute.xlu0 %48
  %50 = vst [vmem:[#allocation1] ss:$4 sm:$0xff] %v15
  %v51 = vld.sshfl [vmem:[#allocation1] sm:$0xff pattern:$0x73625140]
  %s53 = scalar_lea.vmem [#allocation1], 32
  %54 = vst [vmem:[%s53] ss:$4 sm:$0xff] %v18
  %v55 = vld.sshfl [vmem:[#allocation1 + $0x20] sm:$0xff pattern:$0x73625140]
  %v57 = vunpack.c.l.b16 %v51
  %v58 = vunpack.c.l.b16 %v55
  %v59 = vrot.slane %v57, 2
  %v60 = vrot.slane %v58, 1
  %v61 = vsel %vm33, %v60, %v59
  %v62 = vpack.c.b16 %v61, %v61
  %64 = vst [vmem:[#allocation1] ss:$4 sm:$0xff] %v16
  %v65 = vld.sshfl [vmem:[#allocation1] sm:$0xff pattern:$0x73625140]
  %s68 = scalar_lea.vmem [#allocation1], 32
  %69 = vst [vmem:[%s68] ss:$4 sm:$0xff] %v19
  %v70 = vld.sshfl [vmem:[#allocation1 + $0x20] sm:$0xff pattern:$0x73625140]
  %v72 = vunpack.c.l.b16 %v65
  %v73 = vunpack.c.l.b16 %v70
  %v74 = vrot.slane %v73, 7
  %v75 = vsel %vm33, %v74, %v72
  %v76 = vpack.c.b16 %v75, %v75
  %77 = vrot.lane.b32.xlu0 %v76, 64
  %v78 = vpop.permute.xlu0 %77
  %79 = vst [vmem:[#allocation1] ss:$4 sm:$0xff] %v16
  %v80 = vld.sshfl [vmem:[#allocation1] sm:$0xff pattern:$0x73625140]
  %s82 = scalar_lea.vmem [#allocation1], 32
  %83 = vst [vmem:[%s82] ss:$4 sm:$0xff] %v19
  %v84 = vld.sshfl [vmem:[#allocation1 + $0x20] sm:$0xff pattern:$0x73625140]
  %v86 = vunpack.c.l.b16 %v80
  %v87 = vunpack.c.l.b16 %v84
  %v88 = vrot.slane %v86, 1
  %v89 = vsel %vm33, %v87, %v88
  %v90 = vpack.c.b16 %v89, %v89
  %91 = vst [vmem:[#allocation1] ss:$4 sm:$0xff] %v16
  %v92 = vld.sshfl [vmem:[#allocation1] sm:$0xff pattern:$0x73625140]
  %s94 = scalar_lea.vmem [#allocation1], 32
  %95 = vst [vmem:[%s94] ss:$4 sm:$0xff] %v19
  %v96 = vld.sshfl [vmem:[#allocation1 + $0x20] sm:$0xff pattern:$0x73625140]
  %v98 = vunpack.c.l.b16 %v92
  %v99 = vunpack.c.l.b16 %v96
  %v100 = vrot.slane %v98, 2
  %v101 = vrot.slane %v99, 1
  %v102 = vsel %vm33, %v101, %v100
  %v103 = vpack.c.b16 %v102, %v102
  %104 = vrot.lane.b32.xlu0 %v103, 64
  %v105 = vpop.permute.xlu0 %104
  %107 = vst [vmem:[#allocation1] ss:$4 sm:$0xff] %v17
  %v108 = vld.sshfl [vmem:[#allocation1] sm:$0xff pattern:$0x73625140]
  %s111 = scalar_lea.vmem [#allocation1], 32
  %112 = vst [vmem:[%s111] ss:$4 sm:$0xff] %v20
  %v113 = vld.sshfl [vmem:[#allocation1 + $0x20] sm:$0xff pattern:$0x73625140]
  %v115 = vunpack.c.l.b16 %v108
  %v116 = vunpack.c.l.b16 %v113
  %v117 = vrot.slane %v116, 7
  %v118 = vsel %vm33, %v117, %v115
  %v119 = vpack.c.b16 %v118, %v118
  %120 = vst [vmem:[#allocation1] ss:$4 sm:$0xff] %v17
  %v121 = vld.sshfl [vmem:[#allocation1] sm:$0xff pattern:$0x73625140]
  %s123 = scalar_lea.vmem [#allocation1], 32
  %124 = vst [vmem:[%s123] ss:$4 sm:$0xff] %v20
  %v125 = vld.sshfl [vmem:[#allocation1 + $0x20] sm:$0xff pattern:$0x73625140]
  %v127 = vunpack.c.l.b16 %v121
  %v128 = vunpack.c.l.b16 %v125
  %v129 = vrot.slane %v127, 1
  %v130 = vsel %vm33, %v128, %v129
  %v131 = vpack.c.b16 %v130, %v130
  %132 = vrot.lane.b32.xlu0 %v131, 64
  %v133 = vpop.permute.xlu0 %132
  %134 = vst [vmem:[#allocation1] ss:$4 sm:$0xff] %v17
  %v135 = vld.sshfl [vmem:[#allocation1] sm:$0xff pattern:$0x73625140]
  %s137 = scalar_lea.vmem [#allocation1], 32
  %138 = vst [vmem:[%s137] ss:$4 sm:$0xff] %v20
  %v139 = vld.sshfl [vmem:[#allocation1 + $0x20] sm:$0xff pattern:$0x73625140]
  %v141 = vunpack.c.l.b16 %v135
  %v142 = vunpack.c.l.b16 %v139
  %v143 = vrot.slane %v141, 2
  %v144 = vrot.slane %v142, 1
  %v145 = vsel %vm33, %v144, %v143
  %v146 = vpack.c.b16 %v145, %v145
  %vm147 = vcmask 523264
  %v150 = vsel %vm147, %v35, %v49
  %v154 = vsel %vm147, %v62, %v78
  %v158 = vsel %vm147, %v90, %v105
  %v162 = vsel %vm147, %v119, %v133
  %v164 = vld [vmem:[%s1] sm:$0xf]
  %v165 = vld [vmem:[%s1 + $0x4] sm:$0xf]
  %v166 = vld [vmem:[%s1 + $0x8] sm:$0xf]
  %v167 = vld [vmem:[%s1 + $0xc] sm:$0xf]
  %v168 = vld [vmem:[%s1 + $0x10] sm:$0xf]
  %v169 = vld [vmem:[%s1 + $0x14] sm:$0xf]
  %v170 = vld [vmem:[%s1 + $0x18] sm:$0xf]
  %v171 = vld [vmem:[%s1 + $0x1c] sm:$0xf]
  %v172 = vld [vmem:[%s1 + $0x20] sm:$0xf]
  %v173 = vld [vmem:[%s1 + $0x24] sm:$0xf]
  %v174 = vld [vmem:[%s1 + $0x28] sm:$0xf]
  %v175 = vld [vmem:[%s1 + $0x2c] sm:$0xf]
  %v176 = vld [vmem:[%s1 + $0x30] sm:$0xf]
  %v177 = vld [vmem:[%s1 + $0x34] sm:$0xf]
  %v178 = vld [vmem:[%s1 + $0x38] sm:$0xf]
  %v179 = vld [vmem:[%s1 + $0x3c] sm:$0xf]
  %v180 = vld [vmem:[%s1 + $0x40] sm:$0xf]
  %v181 = vld [vmem:[%s1 + $0x44] sm:$0xf]
  %v182 = vld [vmem:[%s1 + $0x48] sm:$0xf]
  %v183 = vld [vmem:[%s1 + $0x4c] sm:$0xf]
  %v184 = vld [vmem:[%s1 + $0x50] sm:$0xf]
  %v185 = vld [vmem:[%s1 + $0x54] sm:$0xf]
  %v186 = vld [vmem:[%s1 + $0x58] sm:$0xf]
  %v187 = vld [vmem:[%s1 + $0x5c] sm:$0xf]
  %v188 = vld [vmem:[%s1 + $0x60] sm:$0xf]
  %v189 = vld [vmem:[%s1 + $0x64] sm:$0xf]
  %v190 = vld [vmem:[%s1 + $0x68] sm:$0xf]
  %v191 = vld [vmem:[%s1 + $0x6c] sm:$0xf]
  %v192 = vld [vmem:[%s1 + $0x70] sm:$0xf]
  %v193 = vld [vmem:[%s1 + $0x74] sm:$0xf]
  %v194 = vld [vmem:[%s1 + $0x78] sm:$0xf]
  %v195 = vld [vmem:[%s1 + $0x7c] sm:$0xf]
  %v196 = vld [vmem:[%s1 + $0x80] sm:$0xf]
  %v197 = vld [vmem:[%s1 + $0x84] sm:$0xf]
  %v198 = vld [vmem:[%s1 + $0x88] sm:$0xf]
  %v199 = vld [vmem:[%s1 + $0x8c] sm:$0xf]
  %v200 = vld [vmem:[%s1 + $0x90] sm:$0xf]
  %v201 = vld [vmem:[%s1 + $0x94] sm:$0xf]
  %v202 = vld [vmem:[%s1 + $0x98] sm:$0xf]
  %v203 = vld [vmem:[%s1 + $0x9c] sm:$0xf]
  %v204 = vld [vmem:[%s1 + $0xa0] sm:$0xf]
  %v205 = vld [vmem:[%s1 + $0xa4] sm:$0xf]
  %v206 = vld [vmem:[%s1 + $0xa8] sm:$0xf]
  %v207 = vld [vmem:[%s1 + $0xac] sm:$0xf]
  %v208 = vld [vmem:[%s1 + $0xb0] sm:$0xf]
  %v209 = vld [vmem:[%s1 + $0xb4] sm:$0xf]
  %v210 = vld [vmem:[%s1 + $0xb8] sm:$0xf]
  %v211 = vld [vmem:[%s1 + $0xbc] sm:$0xf]
  %v212 = vld [vmem:[%s1 + $0xc0] sm:$0xf]
  %v213 = vld [vmem:[%s1 + $0xc4] sm:$0xf]
  %v214 = vld [vmem:[%s1 + $0xc8] sm:$0xf]
  %v215 = vld [vmem:[%s1 + $0xcc] sm:$0xf]
  %v216 = vld [vmem:[%s1 + $0xd0] sm:$0xf]
  %v217 = vld [vmem:[%s1 + $0xd4] sm:$0xf]
  %v218 = vld [vmem:[%s1 + $0xd8] sm:$0xf]
  %v219 = vld [vmem:[%s1 + $0xdc] sm:$0xf]
  %v220 = vld [vmem:[%s1 + $0xe0] sm:$0xf]
  %v221 = vld [vmem:[%s1 + $0xe4] sm:$0xf]
  %v222 = vld [vmem:[%s1 + $0xe8] sm:$0xf]
  %v223 = vld [vmem:[%s1 + $0xec] sm:$0xf]
  %v224 = vld [vmem:[%s1 + $0xf0] sm:$0xf]
  %v225 = vld [vmem:[%s1 + $0xf4] sm:$0xf]
  %v226 = vld [vmem:[%s1 + $0xf8] sm:$0xf]
  %v227 = vld [vmem:[%s1 + $0xfc] sm:$0xf]
  %v228 = vld [vmem:[%s1 + $0x100] sm:$0xf]
  %v229 = vld [vmem:[%s1 + $0x104] sm:$0xf]
  %v230 = vld [vmem:[%s1 + $0x108] sm:$0xf]
  %v231 = vld [vmem:[%s1 + $0x10c] sm:$0xf]
  %v232 = vld [vmem:[%s1 + $0x110] sm:$0xf]
  %v233 = vld [vmem:[%s1 + $0x114] sm:$0xf]
  %v234 = vld [vmem:[%s1 + $0x118] sm:$0xf]
  %v235 = vld [vmem:[%s1 + $0x11c] sm:$0xf]
  %v236 = vld [vmem:[%s2] sm:$0x1]
  %v238 = vperm.slane %v236, 0
  %v312 = vunpack.c.l.b16 %v164
  %v313 = vunpack.c.l.b16 %v165
  %v314 = vunpack.c.l.b16 %v166
  %v315 = vunpack.c.l.b16 %v167
  %v316 = vunpack.c.l.b16 %v168
  %v317 = vunpack.c.l.b16 %v169
  %v318 = vunpack.c.l.b16 %v170
  %v319 = vunpack.c.l.b16 %v171
  %v320 = vunpack.c.l.b16 %v172
  %v321 = vunpack.c.l.b16 %v173
  %v322 = vunpack.c.l.b16 %v174
  %v323 = vunpack.c.l.b16 %v175
  %v324 = vunpack.c.l.b16 %v176
  %v325 = vunpack.c.l.b16 %v177
  %v326 = vunpack.c.l.b16 %v178
  %v327 = vunpack.c.l.b16 %v179
  %v328 = vunpack.c.l.b16 %v180
  %v329 = vunpack.c.l.b16 %v181
  %v330 = vunpack.c.l.b16 %v182
  %v331 = vunpack.c.l.b16 %v183
  %v332 = vunpack.c.l.b16 %v184
  %v333 = vunpack.c.l.b16 %v185
  %v334 = vunpack.c.l.b16 %v186
  %v335 = vunpack.c.l.b16 %v187
  %v336 = vunpack.c.l.b16 %v188
  %v337 = vunpack.c.l.b16 %v189
  %v338 = vunpack.c.l.b16 %v190
  %v339 = vunpack.c.l.b16 %v191
  %v340 = vunpack.c.l.b16 %v192
  %v341 = vunpack.c.l.b16 %v193
  %v342 = vunpack.c.l.b16 %v194
  %v343 = vunpack.c.l.b16 %v195
  %v344 = vunpack.c.l.b16 %v196
  %v345 = vunpack.c.l.b16 %v197
  %v346 = vunpack.c.l.b16 %v198
  %v347 = vunpack.c.l.b16 %v199
  %v348 = vunpack.c.l.b16 %v200
  %v349 = vunpack.c.l.b16 %v201
  %v350 = vunpack.c.l.b16 %v202
  %v351 = vunpack.c.l.b16 %v203
  %v352 = vunpack.c.l.b16 %v204
  %v353 = vunpack.c.l.b16 %v205
  %v354 = vunpack.c.l.b16 %v206
  %v355 = vunpack.c.l.b16 %v207
  %v356 = vunpack.c.l.b16 %v208
  %v357 = vunpack.c.l.b16 %v209
  %v358 = vunpack.c.l.b16 %v210
  %v359 = vunpack.c.l.b16 %v211
  %v360 = vunpack.c.l.b16 %v212
  %v361 = vunpack.c.l.b16 %v213
  %v362 = vunpack.c.l.b16 %v214
  %v363 = vunpack.c.l.b16 %v215
  %v364 = vunpack.c.l.b16 %v216
  %v365 = vunpack.c.l.b16 %v217
  %v366 = vunpack.c.l.b16 %v218
  %v367 = vunpack.c.l.b16 %v219
  %v368 = vunpack.c.l.b16 %v220
  %v369 = vunpack.c.l.b16 %v221
  %v370 = vunpack.c.l.b16 %v222
  %v371 = vunpack.c.l.b16 %v223
  %v372 = vunpack.c.l.b16 %v224
  %v373 = vunpack.c.l.b16 %v225
  %v374 = vunpack.c.l.b16 %v226
  %v375 = vunpack.c.l.b16 %v227
  %v376 = vunpack.c.l.b16 %v228
  %v377 = vunpack.c.l.b16 %v229
  %v378 = vunpack.c.l.b16 %v230
  %v379 = vunpack.c.l.b16 %v231
  %v380 = vunpack.c.l.b16 %v232
  %v381 = vunpack.c.l.b16 %v233
  %v382 = vunpack.c.l.b16 %v234
  %v383 = vunpack.c.l.b16 %v235
  %v384 = vpack.c.b16 %v313, %v312
  %v385 = vpack.c.b16 %v315, %v314
  %v386 = vpack.c.b16 %v317, %v316
  %v387 = vpack.c.b16 %v319, %v318
  %v388 = vpack.c.b16 %v321, %v320
  %v389 = vpack.c.b16 %v323, %v322
  %v390 = vpack.c.b16 %v325, %v324
  %v391 = vpack.c.b16 %v327, %v326
  %v392 = vpack.c.b16 %v329, %v328
  %v393 = vpack.c.b16 %v331, %v330
  %v394 = vpack.c.b16 %v333, %v332
  %v395 = vpack.c.b16 %v335, %v334
  %v396 = vpack.c.b16 %v337, %v336
  %v397 = vpack.c.b16 %v339, %v338
  %v398 = vpack.c.b16 %v341, %v340
  %v399 = vpack.c.b16 %v343, %v342
  %v400 = vpack.c.b16 %v345, %v344
  %v401 = vpack.c.b16 %v347, %v346
  %v402 = vpack.c.b16 %v349, %v348
  %v403 = vpack.c.b16 %v351, %v350
  %v404 = vpack.c.b16 %v353, %v352
  %v405 = vpack.c.b16 %v355, %v354
  %v406 = vpack.c.b16 %v357, %v356
  %v407 = vpack.c.b16 %v359, %v358
  %v408 = vpack.c.b16 %v361, %v360
  %v409 = vpack.c.b16 %v363, %v362
  %v410 = vpack.c.b16 %v365, %v364
  %v411 = vpack.c.b16 %v367, %v366
  %v412 = vpack.c.b16 %v369, %v368
  %v413 = vpack.c.b16 %v371, %v370
  %v414 = vpack.c.b16 %v373, %v372
  %v415 = vpack.c.b16 %v375, %v374
  %v416 = vpack.c.b16 %v377, %v376
  %v417 = vpack.c.b16 %v379, %v378
  %v418 = vpack.c.b16 %v381, %v380
  %v419 = vpack.c.b16 %v383, %v382
  %v457 = vsel %vm147, %v146, 0
  %459 = vmatpush.bf16.msra.mxu0 %v391
  %460 = vmatpush.bf16.msra.mxu0 %v390
  %461 = vmatpush.bf16.msra.mxu0 %v389
  %462 = vmatpush.bf16.msra.mxu0 %v388
  %463 = vmatpush.bf16.msra.mxu0 %v387
  %464 = vmatpush.bf16.msra.mxu0 %v386
  %465 = vmatpush.bf16.msra.mxu0 %v385
  %466 = vmatpush.bf16.msra.mxu0 %v384
  %467 = vmatmul.bf16.gmra.mxu0 %v150
  %v468 = vpop.f32.mrf.mxu0
  %v469 = vadd.f32 %v238, %v468
  %v470 = vpop.f32.mrf.mxu0
  %471 = vdwg.mxu0
  %472 = vmatpush.bf16.msra.mxu0 %v399
  %473 = vmatpush.bf16.msra.mxu0 %v398
  %474 = vmatpush.bf16.msra.mxu0 %v397
  %475 = vmatpush.bf16.msra.mxu0 %v396
  %476 = vmatpush.bf16.msra.mxu0 %v395
  %477 = vmatpush.bf16.msra.mxu0 %v394
  %478 = vmatpush.bf16.msra.mxu0 %v393
  %479 = vmatpush.bf16.msra.mxu0 %v392
  %480 = vmatmul.bf16.gmra.mxu0 %v154
  %v481 = vpop.f32.mrf.mxu0
  %v482 = vadd.f32 %v469, %v481
  %v483 = vpop.f32.mrf.mxu0
  %484 = vdwg.mxu0
  %485 = vmatpush.bf16.msra.mxu0 %v407
  %486 = vmatpush.bf16.msra.mxu0 %v406
  %487 = vmatpush.bf16.msra.mxu0 %v405
  %488 = vmatpush.bf16.msra.mxu0 %v404
  %489 = vmatpush.bf16.msra.mxu0 %v403
  %490 = vmatpush.bf16.msra.mxu0 %v402
  %491 = vmatpush.bf16.msra.mxu0 %v401
  %492 = vmatpush.bf16.msra.mxu0 %v400
  %493 = vmatmul.bf16.gmra.mxu0 %v158
  %v494 = vpop.f32.mrf.mxu0
  %v495 = vadd.f32 %v482, %v494
  %v496 = vpop.f32.mrf.mxu0
  %497 = vdwg.mxu0
  %498 = vmatpush.bf16.msra.mxu0 %v415
  %499 = vmatpush.bf16.msra.mxu0 %v414
  %500 = vmatpush.bf16.msra.mxu0 %v413
  %501 = vmatpush.bf16.msra.mxu0 %v412
  %502 = vmatpush.bf16.msra.mxu0 %v411
  %503 = vmatpush.bf16.msra.mxu0 %v410
  %504 = vmatpush.bf16.msra.mxu0 %v409
  %505 = vmatpush.bf16.msra.mxu0 %v408
  %506 = vmatmul.bf16.gmra.mxu0 %v162
  %v507 = vpop.f32.mrf.mxu0
  %v508 = vadd.f32 %v495, %v507
  %v509 = vpop.f32.mrf.mxu0
  %510 = vdwg.mxu0
  %511 = vmatpush.bf16.msra.mxu0 0
  %512 = vmatpush.bf16.msra.mxu0 0
  %513 = vmatpush.bf16.msra.mxu0 0
  %514 = vmatpush.bf16.msra.mxu0 0
  %515 = vmatpush.bf16.msra.mxu0 %v419
  %516 = vmatpush.bf16.msra.mxu0 %v418
  %517 = vmatpush.bf16.msra.mxu0 %v417
  %518 = vmatpush.bf16.msra.mxu0 %v416
  %519 = vmatmul.bf16.gmra.mxu0 %v457
  %v520 = vpop.f32.mrf.mxu0
  %v521 = vadd.f32 %v508, %v520
  %v522 = vpop.f32.mrf.mxu0
  %523 = vdwg.mxu0
  %v524 = vmax.f32 %v521, 0.0
  %v526 = vrot.slane %v524, 1
  %v528 = vpack.c.bf16 %v524, %v524
  %v529 = vpack.c.bf16 %v526, %v526
  %vm530 = vcmask 516096
  %vm531 = vsmask.f32 256
  %vm532 = vmand %vm530, %vm531
  %v533 = vld [vmem:[%s3] sm:$0x1]
  %v534 = vsel %vm532, %v528, %v533
  %535 = vst [vmem:[%s3] sm:$0x1] %v534
  %v536 = vld [vmem:[%s3 + $0x1] sm:$0x1]
  %v537 = vsel %vm532, %v529, %v536
  %538 = vst [vmem:[%s3 + $0x1] sm:$0x1] %v537
  // Predicated region
  $region14: #{dqn_forward.6} parent=0 // pred_check
    _
  $region15: #{dqn_forward.6} parent=0 // pred_check_branch
    %540 = sbr.rel (0) target = $region17
  $region16: #{dqn_forward.6} parent=0 // pred_region
    _
  $region17: #{dqn_forward.6} parent=0 // pred_fallthru
    _
  // Predicated region
  $region18: #{dqn_forward.6} parent=0 // pred_check
    _
  $region19: #{dqn_forward.6} parent=0 // pred_check_branch
    %542 = sbr.rel (0) target = $region21
  $region20: #{dqn_forward.6} parent=0 // pred_region
    _
  $region21: #{dqn_forward.6} parent=0 // pred_fallthru
    _

</llo_original>
